<compile_context>
chip_gen: v7x
topology: tpu7x:2x2x1
jax: 0.10.0
libtpu: 0.0.40
codegen_flags: <defaults>
</compile_context>

<pallas_src>
import functools

import jax
import jax.numpy as jnp
import numpy as np
from jax import lax
from jax.experimental import pallas as pl
from jax.experimental.pallas import tpu as pltpu

K = 3            # kernel_size
PAD = K // 2     # 'same' padding


def _tap_offsets(W):
    """Flat-index offset of each of the 9 taps, (ky, kx) row-major."""
    return tuple((ky - PAD) * W + (kx - PAD) for ky in range(K) for kx in range(K))


def _build_masks(N, C, H, W):
    """(9*C, N*H*W) f32 validity masks.

    For tap t=(ky,kx), flat position p=(n,y,x) is valid iff (y+dy, x+dx) stays
    inside the HxW image (dy=ky-1, dx=kx-1).  Rows are repeated C times so the
    mask multiplies the full im2col'd (9*C, N*H*W) patch slab in one shot.
    The mask also kills any wrap-around contamination from the lane roll.
    """
    ys, xs = np.meshgrid(np.arange(H), np.arange(W), indexing="ij")
    rows = []
    for ky in range(K):
        for kx in range(K):
            dy, dx = ky - PAD, kx - PAD
            m = ((ys + dy >= 0) & (ys + dy < H) &
                 (xs + dx >= 0) & (xs + dx < W)).astype(np.float32).reshape(-1)
            rows.append(np.tile(m, N))              # repeat per batch element
    m9 = np.stack(rows)                             # (9, N*H*W)
    return jnp.asarray(np.repeat(m9, C, axis=0))    # (9*C, N*H*W)


def _fract_in2_kernel(x_ref, mask_ref, w_ref, b_ref, alpha_ref, o_ref,
                      *, N, C, H, W):
    """Fused fract1 -> fract2, fract3, channel concat.

    x_ref    : (N, C, H*W)        NCHW input, spatial flattened
    mask_ref : (9*C, N*H*W)       per-tap boundary masks (im2col row order)
    w_ref    : (6, C, 9*C)        packed conv weights, (Cout, tap*Cin)
    b_ref    : (6, C, 1)          conv biases
    alpha_ref: (1, 1)             shared PReLU parameter
    o_ref    : (N, 2*C, H*W)      NCHW output (res ++ out on channel axis)
    """
    HW = H * W
    NHW = N * HW
    offs = _tap_offsets(W)

    # Lane-dense activation: (C, N*H*W) — batch folded onto the lane axis.
    x = jnp.concatenate([x_ref[n] for n in range(N)], axis=1)
    mask = mask_ref[...]                      # (9*C, N*H*W)
    a = alpha_ref[0, 0]                       # shared PReLU alpha

    def im2col(h):
        cols = []
        for off in offs:
            if off == 0:
                cols.append(h)
            else:
                # shifted[p] = h[p + off]  ==  roll(h, -off)
                cols.append(pltpu.roll(h, shift=(-off) % NHW, axis=1))
        return jnp.concatenate(cols, axis=0) * mask          # (9*C, N*H*W)

    def conv(patches, k):
        w = w_ref[k]                          # (C, 9*C)
        b = b_ref[k]                          # (C, 1)
        return jnp.dot(w, patches, preferred_element_type=jnp.float32) + b

    def prelu(v):
        return jnp.where(v >= 0, v, a * v)

    px = im2col(x)                            # reused by fract1 and fract3

    # fract1
    h = prelu(conv(px, 0))
    r = conv(im2col(h), 1) + x
    # fract2
    h = prelu(conv(im2col(r), 2))
    r = conv(im2col(h), 3) + r
    # fract3
    h = prelu(conv(px, 4))
    o = conv(im2col(h), 5) + x

    y = jnp.concatenate([r, o], axis=0)       # (2*C, N*H*W)  == cat([res,out],1)
    for n in range(N):
        o_ref[n] = y[:, n * HW:(n + 1) * HW].astype(o_ref.dtype)


def fract_in2_forward(x_nchw, params):
    """fractIn2.forward: res = f2(f1(x)); out = f3(x); cat([res, out], dim=1)."""
    N, C, H, W = x_nchw.shape
    HW = H * W

    def pack_w(w_hwio):                       # (3,3,Cin,Cout) -> (Cout, 9*Cin)
        return jnp.transpose(w_hwio, (3, 0, 1, 2)).reshape(C, K * K * C)

    w_list, b_list = [], []
    for name in ("fract1", "fract2", "fract3"):
        w1, b1, alpha, w2, b2 = params[name]
        w_list += [pack_w(w1), pack_w(w2)]
        b_list += [b1.reshape(C, 1), b2.reshape(C, 1)]
    w_all = jnp.stack(w_list)                 # (6, C, 9*C)
    b_all = jnp.stack(b_list)                 # (6, C, 1)
    alpha = params["fract1"][2]               # (1, 1) shared nn.PReLU()

    masks = _build_masks(N, C, H, W)          # (9*C, N*H*W)
    x_flat = x_nchw.reshape(N, C, HW)

    kernel = functools.partial(_fract_in2_kernel, N=N, C=C, H=H, W=W)
    out = pl.pallas_call(
        kernel,
        out_shape=jax.ShapeDtypeStruct((N, 2 * C, HW), jnp.float32),
        grid_spec=pltpu.PrefetchScalarGridSpec(
            num_scalar_prefetch=0,
            grid=(1,),
            in_specs=[
                pl.BlockSpec((N, C, HW), lambda i: (0, 0, 0)),
                pl.BlockSpec((K * K * C, N * HW), lambda i: (0, 0)),
                pl.BlockSpec((6, C, K * K * C), lambda i: (0, 0, 0)),
                pl.BlockSpec((6, C, 1), lambda i: (0, 0, 0)),
                pl.BlockSpec((1, 1), lambda i: (0, 0)),
            ],
            out_specs=pl.BlockSpec((N, 2 * C, HW), lambda i: (0, 0, 0)),
        ),
        compiler_params=pltpu.CompilerParams(dimension_semantics=("arbitrary",)),
    )(x_flat, masks, w_all, b_all, alpha)
    return out.reshape(N, 2 * C, H, W)


# ---------------- pure-JAX reference (for correctness check) ----------------
def _conv_ref(x, w, b):
    y = lax.conv_general_dilated(x, w, (1, 1), "SAME",
                                 dimension_numbers=("NHWC", "HWIO", "NHWC"))
    return y + b.reshape(1, 1, 1, -1)


def _rcb_ref(x, w1, b1, alpha, w2, b2):
    h = _conv_ref(x, w1, b1.reshape(-1))
    h = jnp.where(h >= 0, h, alpha[0, 0] * h)
    h = _conv_ref(h, w2, b2.reshape(-1))
    return h + x


def _fract_in2_ref(x_nchw, params):
    x = jnp.transpose(x_nchw, (0, 2, 3, 1))
    res = _rcb_ref(x, *params["fract1"])
    res = _rcb_ref(res, *params["fract2"])
    out = _rcb_ref(x, *params["fract3"])
    y = jnp.concatenate([res, out], axis=-1)
    return jnp.transpose(y, (0, 3, 1, 2))


if __name__ == "__main__":
    N, C, H, W = 2, 4, 16, 16                 # n_feats = 4, kernel_size = 3
    key = jax.random.PRNGKey(0)
    kx, *kw = jax.random.split(key, 1 + 12)

    x = jax.random.normal(kx, (N, C, H, W), jnp.float32)

    def init_conv(k):
        ka, kb = jax.random.split(k)
        w = jax.random.normal(ka, (K, K, C, C), jnp.float32) * 0.1
        b = (jax.random.normal(kb, (C,), jnp.float32) * 0.1).reshape(1, C)
        return w, b

    alpha = jnp.full((1, 1), 0.25, jnp.float32)   # shared nn.PReLU() parameter

    params = {}
    for i, name in enumerate(["fract1", "fract2", "fract3"]):
        w1, b1 = init_conv(kw[4 * i + 0])
        w2, b2 = init_conv(kw[4 * i + 1])
        params[name] = (w1, b1, alpha, w2, b2)

    y = jax.block_until_ready(fract_in2_forward(x, params))
    y_ref = jax.block_until_ready(_fract_in2_ref(x, params))

    assert y.shape == (N, 2 * C, H, W), y.shape
    np.testing.assert_allclose(np.asarray(y), np.asarray(y_ref),
                               atol=2e-4, rtol=2e-4)
    print("KERNEL_OK")
</pallas_src>

<mosaic_0001>
module attributes {stable_mosaic.version = 11 : i64} {
  func.func @_fract_in2_kernel(%arg0: i32, %arg1: memref<2x4x256xf32, #tpu.memory_space<vmem>>, %arg2: memref<36x512xf32, #tpu.memory_space<vmem>>, %arg3: memref<6x4x36xf32, #tpu.memory_space<vmem>>, %arg4: memref<6x4x1xf32, #tpu.memory_space<vmem>>, %arg5: memref<1x1xf32, #tpu.memory_space<vmem>>, %arg6: memref<2x8x256xf32, #tpu.memory_space<vmem>>) attributes {dimension_semantics = [#tpu.dimension_semantics<arbitrary>], iteration_bounds = array<i64: 1>, scalar_prefetch = 0 : i64, scratch_operands = 0 : i64, tpu.core_type = #tpu.core_type<tc>, window_params = [{pipeline_mode = #tpu.pipeline_mode<synchronous>, transform_indices = @transform_0, window_bounds = array<i64: 2, 4, 256>}, {pipeline_mode = #tpu.pipeline_mode<synchronous>, transform_indices = @transform_1, window_bounds = array<i64: 36, 512>}, {pipeline_mode = #tpu.pipeline_mode<synchronous>, transform_indices = @transform_2, window_bounds = array<i64: 6, 4, 36>}, {pipeline_mode = #tpu.pipeline_mode<synchronous>, transform_indices = @transform_3, window_bounds = array<i64: 6, 4, 1>}, {pipeline_mode = #tpu.pipeline_mode<synchronous>, transform_indices = @transform_4, window_bounds = array<i64: 1, 1>}, {pipeline_mode = #tpu.pipeline_mode<synchronous>, transform_indices = @transform_5, window_bounds = array<i64: 2, 8, 256>}]} {
    %c0 = arith.constant 0 : index
    %c0_0 = arith.constant 0 : index
    %c0_1 = arith.constant 0 : index
    %0 = vector.load %arg1[%c0, %c0_0, %c0_1] : memref<2x4x256xf32, #tpu.memory_space<vmem>>, vector<1x4x256xf32>
    %1 = vector.shape_cast %0 : vector<1x4x256xf32> to vector<4x256xf32>
    %c1 = arith.constant 1 : index
    %c0_2 = arith.constant 0 : index
    %c0_3 = arith.constant 0 : index
    %2 = vector.load %arg1[%c1, %c0_2, %c0_3] : memref<2x4x256xf32, #tpu.memory_space<vmem>>, vector<1x4x256xf32>
    %3 = vector.shape_cast %2 : vector<1x4x256xf32> to vector<4x256xf32>
    %4 = tpu.concatenate %1, %3 in 1 : vector<4x256xf32>, vector<4x256xf32> -> vector<4x512xf32>
    %c0_4 = arith.constant 0 : index
    %c0_5 = arith.constant 0 : index
    %5 = vector.load %arg2[%c0_4, %c0_5] : memref<36x512xf32, #tpu.memory_space<vmem>>, vector<36x512xf32>
    %c0_6 = arith.constant 0 : index
    %c0_7 = arith.constant 0 : index
    %6 = vector.load %arg5[%c0_6, %c0_7] : memref<1x1xf32, #tpu.memory_space<vmem>>, vector<1x1xf32>
    %7 = vector.extract %6[0, 0] : f32 from vector<1x1xf32>
    %c17_i32 = arith.constant 17 : i32
    %8 = tpu.dynamic_rotate %4 by %c17_i32 dim 1 : vector<4x512xf32>, i32 -> vector<4x512xf32>
    %c16_i32 = arith.constant 16 : i32
    %9 = tpu.dynamic_rotate %4 by %c16_i32 dim 1 : vector<4x512xf32>, i32 -> vector<4x512xf32>
    %c15_i32 = arith.constant 15 : i32
    %10 = tpu.dynamic_rotate %4 by %c15_i32 dim 1 : vector<4x512xf32>, i32 -> vector<4x512xf32>
    %c1_i32 = arith.constant 1 : i32
    %11 = tpu.dynamic_rotate %4 by %c1_i32 dim 1 : vector<4x512xf32>, i32 -> vector<4x512xf32>
    %c511_i32 = arith.constant 511 : i32
    %12 = tpu.dynamic_rotate %4 by %c511_i32 dim 1 : vector<4x512xf32>, i32 -> vector<4x512xf32>
    %c497_i32 = arith.constant 497 : i32
    %13 = tpu.dynamic_rotate %4 by %c497_i32 dim 1 : vector<4x512xf32>, i32 -> vector<4x512xf32>
    %c496_i32 = arith.constant 496 : i32
    %14 = tpu.dynamic_rotate %4 by %c496_i32 dim 1 : vector<4x512xf32>, i32 -> vector<4x512xf32>
    %c495_i32 = arith.constant 495 : i32
    %15 = tpu.dynamic_rotate %4 by %c495_i32 dim 1 : vector<4x512xf32>, i32 -> vector<4x512xf32>
    %16 = tpu.concatenate %8, %9, %10, %11, %4, %12, %13, %14, %15 in 0 : vector<4x512xf32>, vector<4x512xf32>, vector<4x512xf32>, vector<4x512xf32>, vector<4x512xf32>, vector<4x512xf32>, vector<4x512xf32>, vector<4x512xf32>, vector<4x512xf32> -> vector<36x512xf32>
    %17 = arith.mulf %16, %5 : vector<36x512xf32>
    %c0_8 = arith.constant 0 : index
    %c0_9 = arith.constant 0 : index
    %c0_10 = arith.constant 0 : index
    %18 = vector.load %arg3[%c0_8, %c0_9, %c0_10] : memref<6x4x36xf32, #tpu.memory_space<vmem>>, vector<1x4x36xf32>
    %19 = vector.shape_cast %18 : vector<1x4x36xf32> to vector<4x36xf32>
    %c0_11 = arith.constant 0 : index
    %c0_12 = arith.constant 0 : index
    %c0_13 = arith.constant 0 : index
    %20 = vector.load %arg4[%c0_11, %c0_12, %c0_13] : memref<6x4x1xf32, #tpu.memory_space<vmem>>, vector<1x4x1xf32>
    %21 = vector.shape_cast %20 : vector<1x4x1xf32> to vector<4x1xf32>
    %cst = arith.constant dense<0.000000e+00> : vector<4x512xf32>
    %22 = tpu.matmul %19, %17, %cst {dimension_numbers = #tpu.dot_dimension_numbers<[1], [0], [0], [1], [0, 0, 1, 1], [], []>} : vector<4x36xf32>, vector<36x512xf32>, vector<4x512xf32> -> vector<4x512xf32>
    %23 = vector.broadcast %21 : vector<4x1xf32> to vector<4x512xf32>
    %24 = arith.addf %22, %23 : vector<4x512xf32>
    %cst_14 = arith.constant 0.000000e+00 : f32
    %25 = vector.broadcast %cst_14 : f32 to vector<4x512xf32>
    %26 = arith.cmpf oge, %24, %25 : vector<4x512xf32>
    %27 = vector.broadcast %7 : f32 to vector<4x512xf32>
    %28 = arith.mulf %27, %24 : vector<4x512xf32>
    %29 = arith.select %26, %24, %28 : vector<4x512xi1>, vector<4x512xf32>
    %c17_i32_15 = arith.constant 17 : i32
    %30 = tpu.dynamic_rotate %29 by %c17_i32_15 dim 1 : vector<4x512xf32>, i32 -> vector<4x512xf32>
    %c16_i32_16 = arith.constant 16 : i32
    %31 = tpu.dynamic_rotate %29 by %c16_i32_16 dim 1 : vector<4x512xf32>, i32 -> vector<4x512xf32>
    %c15_i32_17 = arith.constant 15 : i32
    %32 = tpu.dynamic_rotate %29 by %c15_i32_17 dim 1 : vector<4x512xf32>, i32 -> vector<4x512xf32>
    %c1_i32_18 = arith.constant 1 : i32
    %33 = tpu.dynamic_rotate %29 by %c1_i32_18 dim 1 : vector<4x512xf32>, i32 -> vector<4x512xf32>
    %c511_i32_19 = arith.constant 511 : i32
    %34 = tpu.dynamic_rotate %29 by %c511_i32_19 dim 1 : vector<4x512xf32>, i32 -> vector<4x512xf32>
    %c497_i32_20 = arith.constant 497 : i32
    %35 = tpu.dynamic_rotate %29 by %c497_i32_20 dim 1 : vector<4x512xf32>, i32 -> vector<4x512xf32>
    %c496_i32_21 = arith.constant 496 : i32
    %36 = tpu.dynamic_rotate %29 by %c496_i32_21 dim 1 : vector<4x512xf32>, i32 -> vector<4x512xf32>
    %c495_i32_22 = arith.constant 495 : i32
    %37 = tpu.dynamic_rotate %29 by %c495_i32_22 dim 1 : vector<4x512xf32>, i32 -> vector<4x512xf32>
    %38 = tpu.concatenate %30, %31, %32, %33, %29, %34, %35, %36, %37 in 0 : vector<4x512xf32>, vector<4x512xf32>, vector<4x512xf32>, vector<4x512xf32>, vector<4x512xf32>, vector<4x512xf32>, vector<4x512xf32>, vector<4x512xf32>, vector<4x512xf32> -> vector<36x512xf32>
    %39 = arith.mulf %38, %5 : vector<36x512xf32>
    %c1_23 = arith.constant 1 : index
    %c0_24 = arith.constant 0 : index
    %c0_25 = arith.constant 0 : index
    %40 = vector.load %arg3[%c1_23, %c0_24, %c0_25] : memref<6x4x36xf32, #tpu.memory_space<vmem>>, vector<1x4x36xf32>
    %41 = vector.shape_cast %40 : vector<1x4x36xf32> to vector<4x36xf32>
    %c1_26 = arith.constant 1 : index
    %c0_27 = arith.constant 0 : index
    %c0_28 = arith.constant 0 : index
    %42 = vector.load %arg4[%c1_26, %c0_27, %c0_28] : memref<6x4x1xf32, #tpu.memory_space<vmem>>, vector<1x4x1xf32>
    %43 = vector.shape_cast %42 : vector<1x4x1xf32> to vector<4x1xf32>
    %cst_29 = arith.constant dense<0.000000e+00> : vector<4x512xf32>
    %44 = tpu.matmul %41, %39, %cst_29 {dimension_numbers = #tpu.dot_dimension_numbers<[1], [0], [0], [1], [0, 0, 1, 1], [], []>} : vector<4x36xf32>, vector<36x512xf32>, vector<4x512xf32> -> vector<4x512xf32>
    %45 = vector.broadcast %43 : vector<4x1xf32> to vector<4x512xf32>
    %46 = arith.addf %44, %45 : vector<4x512xf32>
    %47 = arith.addf %46, %4 : vector<4x512xf32>
    %c17_i32_30 = arith.constant 17 : i32
    %48 = tpu.dynamic_rotate %47 by %c17_i32_30 dim 1 : vector<4x512xf32>, i32 -> vector<4x512xf32>
    %c16_i32_31 = arith.constant 16 : i32
    %49 = tpu.dynamic_rotate %47 by %c16_i32_31 dim 1 : vector<4x512xf32>, i32 -> vector<4x512xf32>
    %c15_i32_32 = arith.constant 15 : i32
    %50 = tpu.dynamic_rotate %47 by %c15_i32_32 dim 1 : vector<4x512xf32>, i32 -> vector<4x512xf32>
    %c1_i32_33 = arith.constant 1 : i32
    %51 = tpu.dynamic_rotate %47 by %c1_i32_33 dim 1 : vector<4x512xf32>, i32 -> vector<4x512xf32>
    %c511_i32_34 = arith.constant 511 : i32
    %52 = tpu.dynamic_rotate %47 by %c511_i32_34 dim 1 : vector<4x512xf32>, i32 -> vector<4x512xf32>
    %c497_i32_35 = arith.constant 497 : i32
    %53 = tpu.dynamic_rotate %47 by %c497_i32_35 dim 1 : vector<4x512xf32>, i32 -> vector<4x512xf32>
    %c496_i32_36 = arith.constant 496 : i32
    %54 = tpu.dynamic_rotate %47 by %c496_i32_36 dim 1 : vector<4x512xf32>, i32 -> vector<4x512xf32>
    %c495_i32_37 = arith.constant 495 : i32
    %55 = tpu.dynamic_rotate %47 by %c495_i32_37 dim 1 : vector<4x512xf32>, i32 -> vector<4x512xf32>
    %56 = tpu.concatenate %48, %49, %50, %51, %47, %52, %53, %54, %55 in 0 : vector<4x512xf32>, vector<4x512xf32>, vector<4x512xf32>, vector<4x512xf32>, vector<4x512xf32>, vector<4x512xf32>, vector<4x512xf32>, vector<4x512xf32>, vector<4x512xf32> -> vector<36x512xf32>
    %57 = arith.mulf %56, %5 : vector<36x512xf32>
    %c2 = arith.constant 2 : index
    %c0_38 = arith.constant 0 : index
    %c0_39 = arith.constant 0 : index
    %58 = vector.load %arg3[%c2, %c0_38, %c0_39] : memref<6x4x36xf32, #tpu.memory_space<vmem>>, vector<1x4x36xf32>
    %59 = vector.shape_cast %58 : vector<1x4x36xf32> to vector<4x36xf32>
    %c2_40 = arith.constant 2 : index
    %c0_41 = arith.constant 0 : index
    %c0_42 = arith.constant 0 : index
    %60 = vector.load %arg4[%c2_40, %c0_41, %c0_42] : memref<6x4x1xf32, #tpu.memory_space<vmem>>, vector<1x4x1xf32>
    %61 = vector.shape_cast %60 : vector<1x4x1xf32> to vector<4x1xf32>
    %cst_43 = arith.constant dense<0.000000e+00> : vector<4x512xf32>
    %62 = tpu.matmul %59, %57, %cst_43 {dimension_numbers = #tpu.dot_dimension_numbers<[1], [0], [0], [1], [0, 0, 1, 1], [], []>} : vector<4x36xf32>, vector<36x512xf32>, vector<4x512xf32> -> vector<4x512xf32>
    %63 = vector.broadcast %61 : vector<4x1xf32> to vector<4x512xf32>
    %64 = arith.addf %62, %63 : vector<4x512xf32>
    %cst_44 = arith.constant 0.000000e+00 : f32
    %65 = vector.broadcast %cst_44 : f32 to vector<4x512xf32>
    %66 = arith.cmpf oge, %64, %65 : vector<4x512xf32>
    %67 = vector.broadcast %7 : f32 to vector<4x512xf32>
    %68 = arith.mulf %67, %64 : vector<4x512xf32>
    %69 = arith.select %66, %64, %68 : vector<4x512xi1>, vector<4x512xf32>
    %c17_i32_45 = arith.constant 17 : i32
    %70 = tpu.dynamic_rotate %69 by %c17_i32_45 dim 1 : vector<4x512xf32>, i32 -> vector<4x512xf32>
    %c16_i32_46 = arith.constant 16 : i32
    %71 = tpu.dynamic_rotate %69 by %c16_i32_46 dim 1 : vector<4x512xf32>, i32 -> vector<4x512xf32>
    %c15_i32_47 = arith.constant 15 : i32
    %72 = tpu.dynamic_rotate %69 by %c15_i32_47 dim 1 : vector<4x512xf32>, i32 -> vector<4x512xf32>
    %c1_i32_48 = arith.constant 1 : i32
    %73 = tpu.dynamic_rotate %69 by %c1_i32_48 dim 1 : vector<4x512xf32>, i32 -> vector<4x512xf32>
    %c511_i32_49 = arith.constant 511 : i32
    %74 = tpu.dynamic_rotate %69 by %c511_i32_49 dim 1 : vector<4x512xf32>, i32 -> vector<4x512xf32>
    %c497_i32_50 = arith.constant 497 : i32
    %75 = tpu.dynamic_rotate %69 by %c497_i32_50 dim 1 : vector<4x512xf32>, i32 -> vector<4x512xf32>
    %c496_i32_51 = arith.constant 496 : i32
    %76 = tpu.dynamic_rotate %69 by %c496_i32_51 dim 1 : vector<4x512xf32>, i32 -> vector<4x512xf32>
    %c495_i32_52 = arith.constant 495 : i32
    %77 = tpu.dynamic_rotate %69 by %c495_i32_52 dim 1 : vector<4x512xf32>, i32 -> vector<4x512xf32>
    %78 = tpu.concatenate %70, %71, %72, %73, %69, %74, %75, %76, %77 in 0 : vector<4x512xf32>, vector<4x512xf32>, vector<4x512xf32>, vector<4x512xf32>, vector<4x512xf32>, vector<4x512xf32>, vector<4x512xf32>, vector<4x512xf32>, vector<4x512xf32> -> vector<36x512xf32>
    %79 = arith.mulf %78, %5 : vector<36x512xf32>
    %c3 = arith.constant 3 : index
    %c0_53 = arith.constant 0 : index
    %c0_54 = arith.constant 0 : index
    %80 = vector.load %arg3[%c3, %c0_53, %c0_54] : memref<6x4x36xf32, #tpu.memory_space<vmem>>, vector<1x4x36xf32>
    %81 = vector.shape_cast %80 : vector<1x4x36xf32> to vector<4x36xf32>
    %c3_55 = arith.constant 3 : index
    %c0_56 = arith.constant 0 : index
    %c0_57 = arith.constant 0 : index
    %82 = vector.load %arg4[%c3_55, %c0_56, %c0_57] : memref<6x4x1xf32, #tpu.memory_space<vmem>>, vector<1x4x1xf32>
    %83 = vector.shape_cast %82 : vector<1x4x1xf32> to vector<4x1xf32>
    %cst_58 = arith.constant dense<0.000000e+00> : vector<4x512xf32>
    %84 = tpu.matmul %81, %79, %cst_58 {dimension_numbers = #tpu.dot_dimension_numbers<[1], [0], [0], [1], [0, 0, 1, 1], [], []>} : vector<4x36xf32>, vector<36x512xf32>, vector<4x512xf32> -> vector<4x512xf32>
    %85 = vector.broadcast %83 : vector<4x1xf32> to vector<4x512xf32>
    %86 = arith.addf %84, %85 : vector<4x512xf32>
    %87 = arith.addf %86, %47 : vector<4x512xf32>
    %c4 = arith.constant 4 : index
    %c0_59 = arith.constant 0 : index
    %c0_60 = arith.constant 0 : index
    %88 = vector.load %arg3[%c4, %c0_59, %c0_60] : memref<6x4x36xf32, #tpu.memory_space<vmem>>, vector<1x4x36xf32>
    %89 = vector.shape_cast %88 : vector<1x4x36xf32> to vector<4x36xf32>
    %c4_61 = arith.constant 4 : index
    %c0_62 = arith.constant 0 : index
    %c0_63 = arith.constant 0 : index
    %90 = vector.load %arg4[%c4_61, %c0_62, %c0_63] : memref<6x4x1xf32, #tpu.memory_space<vmem>>, vector<1x4x1xf32>
    %91 = vector.shape_cast %90 : vector<1x4x1xf32> to vector<4x1xf32>
    %cst_64 = arith.constant dense<0.000000e+00> : vector<4x512xf32>
    %92 = tpu.matmul %89, %17, %cst_64 {dimension_numbers = #tpu.dot_dimension_numbers<[1], [0], [0], [1], [0, 0, 1, 1], [], []>} : vector<4x36xf32>, vector<36x512xf32>, vector<4x512xf32> -> vector<4x512xf32>
    %93 = vector.broadcast %91 : vector<4x1xf32> to vector<4x512xf32>
    %94 = arith.addf %92, %93 : vector<4x512xf32>
    %cst_65 = arith.constant 0.000000e+00 : f32
    %95 = vector.broadcast %cst_65 : f32 to vector<4x512xf32>
    %96 = arith.cmpf oge, %94, %95 : vector<4x512xf32>
    %97 = vector.broadcast %7 : f32 to vector<4x512xf32>
    %98 = arith.mulf %97, %94 : vector<4x512xf32>
    %99 = arith.select %96, %94, %98 : vector<4x512xi1>, vector<4x512xf32>
    %c17_i32_66 = arith.constant 17 : i32
    %100 = tpu.dynamic_rotate %99 by %c17_i32_66 dim 1 : vector<4x512xf32>, i32 -> vector<4x512xf32>
    %c16_i32_67 = arith.constant 16 : i32
    %101 = tpu.dynamic_rotate %99 by %c16_i32_67 dim 1 : vector<4x512xf32>, i32 -> vector<4x512xf32>
    %c15_i32_68 = arith.constant 15 : i32
    %102 = tpu.dynamic_rotate %99 by %c15_i32_68 dim 1 : vector<4x512xf32>, i32 -> vector<4x512xf32>
    %c1_i32_69 = arith.constant 1 : i32
    %103 = tpu.dynamic_rotate %99 by %c1_i32_69 dim 1 : vector<4x512xf32>, i32 -> vector<4x512xf32>
    %c511_i32_70 = arith.constant 511 : i32
    %104 = tpu.dynamic_rotate %99 by %c511_i32_70 dim 1 : vector<4x512xf32>, i32 -> vector<4x512xf32>
    %c497_i32_71 = arith.constant 497 : i32
    %105 = tpu.dynamic_rotate %99 by %c497_i32_71 dim 1 : vector<4x512xf32>, i32 -> vector<4x512xf32>
    %c496_i32_72 = arith.constant 496 : i32
    %106 = tpu.dynamic_rotate %99 by %c496_i32_72 dim 1 : vector<4x512xf32>, i32 -> vector<4x512xf32>
    %c495_i32_73 = arith.constant 495 : i32
    %107 = tpu.dynamic_rotate %99 by %c495_i32_73 dim 1 : vector<4x512xf32>, i32 -> vector<4x512xf32>
    %108 = tpu.concatenate %100, %101, %102, %103, %99, %104, %105, %106, %107 in 0 : vector<4x512xf32>, vector<4x512xf32>, vector<4x512xf32>, vector<4x512xf32>, vector<4x512xf32>, vector<4x512xf32>, vector<4x512xf32>, vector<4x512xf32>, vector<4x512xf32> -> vector<36x512xf32>
    %109 = arith.mulf %108, %5 : vector<36x512xf32>
    %c5 = arith.constant 5 : index
    %c0_74 = arith.constant 0 : index
    %c0_75 = arith.constant 0 : index
    %110 = vector.load %arg3[%c5, %c0_74, %c0_75] : memref<6x4x36xf32, #tpu.memory_space<vmem>>, vector<1x4x36xf32>
    %111 = vector.shape_cast %110 : vector<1x4x36xf32> to vector<4x36xf32>
    %c5_76 = arith.constant 5 : index
    %c0_77 = arith.constant 0 : index
    %c0_78 = arith.constant 0 : index
    %112 = vector.load %arg4[%c5_76, %c0_77, %c0_78] : memref<6x4x1xf32, #tpu.memory_space<vmem>>, vector<1x4x1xf32>
    %113 = vector.shape_cast %112 : vector<1x4x1xf32> to vector<4x1xf32>
    %cst_79 = arith.constant dense<0.000000e+00> : vector<4x512xf32>
    %114 = tpu.matmul %111, %109, %cst_79 {dimension_numbers = #tpu.dot_dimension_numbers<[1], [0], [0], [1], [0, 0, 1, 1], [], []>} : vector<4x36xf32>, vector<36x512xf32>, vector<4x512xf32> -> vector<4x512xf32>
    %115 = vector.broadcast %113 : vector<4x1xf32> to vector<4x512xf32>
    %116 = arith.addf %114, %115 : vector<4x512xf32>
    %117 = arith.addf %116, %4 : vector<4x512xf32>
    %118 = tpu.concatenate %87, %117 in 0 : vector<4x512xf32>, vector<4x512xf32> -> vector<8x512xf32>
    %119 = vector.extract_strided_slice %118 {offsets = [0, 0], sizes = [8, 256], strides = [1, 1]} : vector<8x512xf32> to vector<8x256xf32>
    %c0_80 = arith.constant 0 : index
    %c0_81 = arith.constant 0 : index
    %c0_82 = arith.constant 0 : index
    %120 = vector.load %arg6[%c0_80, %c0_81, %c0_82] : memref<2x8x256xf32, #tpu.memory_space<vmem>>, vector<1x8x256xf32>
    %121 = vector.shape_cast %120 : vector<1x8x256xf32> to vector<8x256xf32>
    %122 = vector.shape_cast %119 : vector<8x256xf32> to vector<1x8x256xf32>
    tpu.vector_store %arg6[%c0_80, %c0_81, %c0_82], %122 {strides = array<i32>} : memref<2x8x256xf32, #tpu.memory_space<vmem>>, vector<1x8x256xf32>,
    %123 = vector.extract_strided_slice %118 {offsets = [0, 256], sizes = [8, 256], strides = [1, 1]} : vector<8x512xf32> to vector<8x256xf32>
    %c1_83 = arith.constant 1 : index
    %c0_84 = arith.constant 0 : index
    %c0_85 = arith.constant 0 : index
    %124 = vector.load %arg6[%c1_83, %c0_84, %c0_85] : memref<2x8x256xf32, #tpu.memory_space<vmem>>, vector<1x8x256xf32>
    %125 = vector.shape_cast %124 : vector<1x8x256xf32> to vector<8x256xf32>
    %126 = vector.shape_cast %123 : vector<8x256xf32> to vector<1x8x256xf32>
    tpu.vector_store %arg6[%c1_83, %c0_84, %c0_85], %126 {strides = array<i32>} : memref<2x8x256xf32, #tpu.memory_space<vmem>>, vector<1x8x256xf32>,
    return
  }
  func.func @transform_0(%arg0: i32) -> (i32, i32, i32) {
    %c0_i32 = arith.constant 0 : i32
    %c0_i32_0 = arith.constant 0 : i32
    %c0_i32_1 = arith.constant 0 : i32
    %c0_i32_2 = arith.constant 0 : i32
    return %c0_i32, %c0_i32_0, %c0_i32_1 : i32, i32, i32
  }
  func.func @transform_1(%arg0: i32) -> (i32, i32) {
    %c0_i32 = arith.constant 0 : i32
    %c0_i32_0 = arith.constant 0 : i32
    %c0_i32_1 = arith.constant 0 : i32
    return %c0_i32, %c0_i32_0 : i32, i32
  }
  func.func @transform_2(%arg0: i32) -> (i32, i32, i32) {
    %c0_i32 = arith.constant 0 : i32
    %c0_i32_0 = arith.constant 0 : i32
    %c0_i32_1 = arith.constant 0 : i32
    %c0_i32_2 = arith.constant 0 : i32
    return %c0_i32, %c0_i32_0, %c0_i32_1 : i32, i32, i32
  }
  func.func @transform_3(%arg0: i32) -> (i32, i32, i32) {
    %c0_i32 = arith.constant 0 : i32
    %c0_i32_0 = arith.constant 0 : i32
    %c0_i32_1 = arith.constant 0 : i32
    %c0_i32_2 = arith.constant 0 : i32
    return %c0_i32, %c0_i32_0, %c0_i32_1 : i32, i32, i32
  }
  func.func @transform_4(%arg0: i32) -> (i32, i32) {
    %c0_i32 = arith.constant 0 : i32
    %c0_i32_0 = arith.constant 0 : i32
    %c0_i32_1 = arith.constant 0 : i32
    return %c0_i32, %c0_i32_0 : i32, i32
  }
  func.func @transform_5(%arg0: i32) -> (i32, i32, i32) {
    %c0_i32 = arith.constant 0 : i32
    %c0_i32_0 = arith.constant 0 : i32
    %c0_i32_1 = arith.constant 0 : i32
    %c0_i32_2 = arith.constant 0 : i32
    return %c0_i32, %c0_i32_0, %c0_i32_1 : i32, i32, i32
  }
}

</mosaic_0001>

<llo_original>
// kernel: tpu_custom_call.1
$region0: #{tpu_custom_call.1}
  #allocation0 [shape = 'u32[]', space=smem, size = 0x4, offset = 0x4, fixed_abs, tag = 'smem constant byte address 0x4 - core index']
  #allocation1 [shape = 'u32[144,128]{1,0:T(1,128)}', space=vmem, size = 0x12000, scoped, tag = 'internal scratch']
  #allocation2 [shape = 'f32[1,1]{1,0:T(1,128)S(1)}', space=vmem, size = 0x200, scoped, tag = 'scoped memory for tpu_custom_call.1']
  %s0 = inlined_call_operand.hbm [shape: f32[2,4,256], index: 0, kind: input, shape index: {}]
  %s1 = inlined_call_operand.hbm [shape: f32[36,512], index: 1, kind: input, shape index: {}]
  %s2 = inlined_call_operand.vmem [shape: f32[6,4,36], index: 2, kind: input, shape index: {}]
  %s3 = inlined_call_operand.vmem [shape: f32[6,4,1], index: 3, kind: input, shape index: {}]
  %s4 = inlined_call_operand.<no memory space> [shape: f32[1,1], index: 4, kind: input, shape index: {}]
  %s5 = inlined_call_operand.hbm [shape: f32[2,8,256], index: 5, kind: output, shape index: {}]
  %s6 = sld [smem:[#allocation0]]
  $region38: #{tpu_custom_call.1} parent=0
    _
  %s8 = ssub.s32 1, %s6
  %s9 = scalar_select 0, %s8, %s6
  %v10 = vstv %s4
  %11 = vst [vmem:[#allocation2] sm:$0x1] %v10
  $region1: #{tpu_custom_call.1} parent=0
    #allocation3 [shape = 'u8[8192]{0}', space=vmem, size = 0x2000, scoped, tag = 'input window, operand 0, single buffered']
    #allocation4 [shape = 's32[1]{0}', space=sflag, size = 0x4, scoped, tag = 'scoped memory for tpu_custom_call.1']
    #allocation5 [shape = 's32[1]{0}', space=sflag, size = 0x4, scoped, tag = 'scoped memory for tpu_custom_call.1']
    #allocation6 [shape = 'u8[81920]{0}', space=vmem, size = 0x14000, scoped, tag = 'input window, operand 1, single buffered']
    #allocation7 [shape = 's32[1]{0}', space=sflag, size = 0x4, scoped, tag = 'scoped memory for tpu_custom_call.1']
    #allocation8 [shape = 'u8[16384]{0}', space=vmem, size = 0x4000, scoped, tag = 'output window, operand 0, single buffered']
    %12 = vsyncpa [#allocation4], 0
    %13 = vsyncpa [#allocation7], 0
    %14 = vsyncpa [#allocation5], 0
    // Predicated region
    $region2: #{tpu_custom_call.1} parent=1 // pred_check
      _
    $region3: #{tpu_custom_call.1} parent=1 // pred_check_branch
      %16 = sbr.rel (0) target = $region5
    $region4: #{tpu_custom_call.1} parent=1 // pred_region
      %s18 = ssub.s32 256, 256
      %19 = vsyncadd [#allocation4], %s18
      %s20 = sshll.u32 [#allocation3], 4
      %s21 = int_to_ptr.vmem [resolvable:$true] %s20
      %26 = dma.hbm_to_vmem [thread:$0]  %s0, 256, %s21, [#allocation4], 128, 128, 8
    $region5: #{tpu_custom_call.1} parent=1 // pred_fallthru
      _
    // Predicated region
    $region6: #{tpu_custom_call.1} parent=1 // pred_check
      _
    $region7: #{tpu_custom_call.1} parent=1 // pred_check_branch
      %28 = sbr.rel (0) target = $region9
    $region8: #{tpu_custom_call.1} parent=1 // pred_region
      %s30 = ssub.s32 2560, 2560
      %31 = vsyncadd [#allocation7], %s30
      %s32 = sshll.u32 [#allocation6], 4
      %s33 = int_to_ptr.vmem [resolvable:$true] %s32
      %38 = dma.hbm_to_vmem [thread:$0]  %s1, 2560, %s33, [#allocation7], 512, 512, 32
    $region9: #{tpu_custom_call.1} parent=1 // pred_fallthru
      _
    // Predicated region
    $region10: #{tpu_custom_call.1} parent=1 // pred_check
      _
    $region11: #{tpu_custom_call.1} parent=1 // pred_check_branch
      %40 = sbr.rel (0) target = $region13
    $region12: #{tpu_custom_call.1} parent=1 // pred_region
      _
    $region13: #{tpu_custom_call.1} parent=1 // pred_fallthru
      _
    // Predicated region
    $region14: #{tpu_custom_call.1} parent=1 // pred_check
      _
    $region15: #{tpu_custom_call.1} parent=1 // pred_check_branch
      %42 = sbr.rel (0) target = $region17
    $region16: #{tpu_custom_call.1} parent=1 // pred_region
      _
    $region17: #{tpu_custom_call.1} parent=1 // pred_fallthru
      _
    // Predicated region
    $region18: #{tpu_custom_call.1} parent=1 // pred_check
      _
    $region19: #{tpu_custom_call.1} parent=1 // pred_check_branch
      %44 = sbr.rel (0) target = $region21
    $region20: #{tpu_custom_call.1} parent=1 // pred_region
      _
    $region21: #{tpu_custom_call.1} parent=1 // pred_fallthru
      _
    // Predicated region
    $region22: #{tpu_custom_call.1} parent=1 // pred_check
      _
    $region23: #{tpu_custom_call.1} parent=1 // pred_check_branch
      %46 = sbr.rel (0) target = $region25
    $region24: #{tpu_custom_call.1} parent=1 // pred_region
      %47 = dma.done [#allocation4], 256
    $region25: #{tpu_custom_call.1} parent=1 // pred_fallthru
      _
    // Predicated region
    $region26: #{tpu_custom_call.1} parent=1 // pred_check
      _
    $region27: #{tpu_custom_call.1} parent=1 // pred_check_branch
      %49 = sbr.rel (0) target = $region29
    $region28: #{tpu_custom_call.1} parent=1 // pred_region
      %50 = dma.done [#allocation7], 2560
    $region29: #{tpu_custom_call.1} parent=1 // pred_fallthru
      _
    %v51 = vld [vmem:[#allocation3] sm:$0xff]
    %s52 = scalar_lea.vmem [#allocation3], 8
    %v53 = vld [vmem:[%s52] sm:$0xff]
    %v55 = vcombine.high %v51, %v51
    %v58 = vcombine.high %v53, %v53
    %v60 = vld [vmem:[#allocation6] sm:$0xff]
    %v61 = vld [vmem:[#allocation6 + $0x8] sm:$0xff]
    %v62 = vld [vmem:[#allocation6 + $0x10] sm:$0xff]
    %v63 = vld [vmem:[#allocation6 + $0x18] sm:$0xff]
    %v64 = vld [vmem:[#allocation6 + $0x20] sm:$0xff]
    %v65 = vld [vmem:[#allocation6 + $0x28] sm:$0xff]
    %v66 = vld [vmem:[#allocation6 + $0x30] sm:$0xff]
    %v67 = vld [vmem:[#allocation6 + $0x38] sm:$0xff]
    %v68 = vld [vmem:[#allocation6 + $0x40] sm:$0xff]
    %v69 = vld [vmem:[#allocation6 + $0x48] sm:$0xff]
    %v70 = vld [vmem:[#allocation6 + $0x50] sm:$0xff]
    %v71 = vld [vmem:[#allocation6 + $0x58] sm:$0xff]
    %v72 = vld [vmem:[#allocation6 + $0x60] sm:$0xff]
    %v73 = vld [vmem:[#allocation6 + $0x68] sm:$0xff]
    %v74 = vld [vmem:[#allocation6 + $0x70] sm:$0xff]
    %v75 = vld [vmem:[#allocation6 + $0x78] sm:$0xff]
    %v76 = vld [vmem:[#allocation6 + $0x80] sm:$0xf]
    %v77 = vld [vmem:[#allocation6 + $0x88] sm:$0xf]
    %v78 = vld [vmem:[#allocation6 + $0x90] sm:$0xf]
    %v79 = vld [vmem:[#allocation6 + $0x98] sm:$0xf]
    %v80 = vld [vmem:[#allocation2] sm:$0x1]
    %s81 = vtos %v80
    %82 = vrot.lane.b32.xlu0 %v51, 17
    %v83 = vpop.permute.xlu0 %82
    %84 = vrot.lane.b32.xlu0 %v55, 17
    %v85 = vpop.permute.xlu0 %84
    %86 = vrot.lane.b32.xlu0 %v53, 17
    %v87 = vpop.permute.xlu0 %86
    %88 = vrot.lane.b32.xlu0 %v58, 17
    %v89 = vpop.permute.xlu0 %88
    %v90 = vlaneseq
    %v91 = vand.u32 %v90, 127
    %vm92 = vcmp.lt.s32.totalorder %v91, 17
    %v93 = vsel %vm92, %v87, %v89
    %v94 = vsel %vm92, %v85, %v87
    %v95 = vsel %vm92, %v83, %v85
    %v96 = vsel %vm92, %v89, %v83
    %97 = vrot.lane.b32.xlu0 %v51, 16
    %v98 = vpop.permute.xlu0 %97
    %99 = vrot.lane.b32.xlu0 %v55, 16
    %v100 = vpop.permute.xlu0 %99
    %101 = vrot.lane.b32.xlu0 %v53, 16
    %v102 = vpop.permute.xlu0 %101
    %103 = vrot.lane.b32.xlu0 %v58, 16
    %v104 = vpop.permute.xlu0 %103
    %vm105 = vcmp.lt.s32.totalorder %v91, 16
    %v106 = vsel %vm105, %v102, %v104
    %v107 = vsel %vm105, %v100, %v102
    %v108 = vsel %vm105, %v98, %v100
    %v109 = vsel %vm105, %v104, %v98
    %110 = vrot.lane.b32.xlu0 %v51, 15
    %v111 = vpop.permute.xlu0 %110
    %112 = vrot.lane.b32.xlu0 %v55, 15
    %v113 = vpop.permute.xlu0 %112
    %114 = vrot.lane.b32.xlu0 %v53, 15
    %v115 = vpop.permute.xlu0 %114
    %116 = vrot.lane.b32.xlu0 %v58, 15
    %v117 = vpop.permute.xlu0 %116
    %vm118 = vcmp.lt.s32.totalorder %v91, 15
    %v119 = vsel %vm118, %v115, %v117
    %v120 = vsel %vm118, %v113, %v115
    %v121 = vsel %vm118, %v111, %v113
    %v122 = vsel %vm118, %v117, %v111
    %123 = vrot.lane.b32.xlu0 %v51, 1
    %v124 = vpop.permute.xlu0 %123
    %125 = vrot.lane.b32.xlu0 %v55, 1
    %v126 = vpop.permute.xlu0 %125
    %127 = vrot.lane.b32.xlu0 %v53, 1
    %v128 = vpop.permute.xlu0 %127
    %129 = vrot.lane.b32.xlu0 %v58, 1
    %v130 = vpop.permute.xlu0 %129
    %vm131 = vcmp.lt.s32.totalorder %v91, 1
    %v132 = vsel %vm131, %v128, %v130
    %v133 = vsel %vm131, %v126, %v128
    %v134 = vsel %vm131, %v124, %v126
    %v135 = vsel %vm131, %v130, %v124
    %136 = vrot.lane.b32.xlu0 %v51, 127
    %v137 = vpop.permute.xlu0 %136
    %138 = vrot.lane.b32.xlu0 %v55, 127
    %v139 = vpop.permute.xlu0 %138
    %140 = vrot.lane.b32.xlu0 %v53, 127
    %v141 = vpop.permute.xlu0 %140
    %142 = vrot.lane.b32.xlu0 %v58, 127
    %v143 = vpop.permute.xlu0 %142
    %vm144 = vcmp.lt.s32.totalorder %v91, 127
    %v145 = vsel %vm144, %v141, %v143
    %v146 = vsel %vm144, %v139, %v141
    %v147 = vsel %vm144, %v137, %v139
    %v148 = vsel %vm144, %v143, %v137
    %149 = vrot.lane.b32.xlu0 %v51, 113
    %v150 = vpop.permute.xlu0 %149
    %151 = vrot.lane.b32.xlu0 %v55, 113
    %v152 = vpop.permute.xlu0 %151
    %153 = vrot.lane.b32.xlu0 %v53, 113
    %v154 = vpop.permute.xlu0 %153
    %155 = vrot.lane.b32.xlu0 %v58, 113
    %v156 = vpop.permute.xlu0 %155
    %vm157 = vcmp.lt.s32.totalorder %v91, 113
    %v158 = vsel %vm157, %v154, %v156
    %v159 = vsel %vm157, %v152, %v154
    %v160 = vsel %vm157, %v150, %v152
    %v161 = vsel %vm157, %v156, %v150
    %162 = vrot.lane.b32.xlu0 %v51, 112
    %v163 = vpop.permute.xlu0 %162
    %164 = vrot.lane.b32.xlu0 %v55, 112
    %v165 = vpop.permute.xlu0 %164
    %166 = vrot.lane.b32.xlu0 %v53, 112
    %v167 = vpop.permute.xlu0 %166
    %168 = vrot.lane.b32.xlu0 %v58, 112
    %v169 = vpop.permute.xlu0 %168
    %vm170 = vcmp.lt.s32.totalorder %v91, 112
    %v171 = vsel %vm170, %v167, %v169
    %v172 = vsel %vm170, %v165, %v167
    %v173 = vsel %vm170, %v163, %v165
    %v174 = vsel %vm170, %v169, %v163
    %175 = vrot.lane.b32.xlu0 %v51, 111
    %v176 = vpop.permute.xlu0 %175
    %177 = vrot.lane.b32.xlu0 %v55, 111
    %v178 = vpop.permute.xlu0 %177
    %179 = vrot.lane.b32.xlu0 %v53, 111
    %v180 = vpop.permute.xlu0 %179
    %181 = vrot.lane.b32.xlu0 %v58, 111
    %v182 = vpop.permute.xlu0 %181
    %vm183 = vcmp.lt.s32.totalorder %v91, 111
    %v184 = vsel %vm183, %v180, %v182
    %v185 = vsel %vm183, %v178, %v180
    %v186 = vsel %vm183, %v176, %v178
    %v187 = vsel %vm183, %v182, %v176
    %v192 = vrot.slane %v109, 4
    %v193 = vrot.slane %v108, 4
    %v194 = vrot.slane %v107, 4
    %v195 = vrot.slane %v106, 4
    %v204 = vrot.slane %v135, 4
    %v205 = vrot.slane %v134, 4
    %v206 = vrot.slane %v133, 4
    %v207 = vrot.slane %v132, 4
    %v216 = vrot.slane %v147, 4
    %v217 = vrot.slane %v146, 4
    %v218 = vrot.slane %v145, 4
    %v219 = vrot.slane %v148, 4
    %v228 = vrot.slane %v173, 4
    %v229 = vrot.slane %v172, 4
    %v230 = vrot.slane %v171, 4
    %v231 = vrot.slane %v174, 4
    %vm236 = vcmask 1043456
    %v237 = vsel %vm236, %v96, %v192
    %v238 = vsel %vm236, %v95, %v193
    %v239 = vsel %vm236, %v94, %v194
    %v240 = vsel %vm236, %v93, %v195
    %v241 = vsel %vm236, %v122, %v204
    %v242 = vsel %vm236, %v121, %v205
    %v243 = vsel %vm236, %v120, %v206
    %v244 = vsel %vm236, %v119, %v207
    %v245 = vsel %vm236, %v51, %v216
    %v246 = vsel %vm236, %v55, %v217
    %v247 = vsel %vm236, %v53, %v218
    %v248 = vsel %vm236, %v58, %v219
    %v249 = vsel %vm236, %v160, %v228
    %v250 = vsel %vm236, %v159, %v229
    %v251 = vsel %vm236, %v158, %v230
    %v252 = vsel %vm236, %v161, %v231
    %v253 = vmul.f32 %v237, %v60
    %v254 = vmul.f32 %v238, %v61
    %v255 = vmul.f32 %v239, %v62
    %v256 = vmul.f32 %v240, %v63
    %v257 = vmul.f32 %v241, %v64
    %v258 = vmul.f32 %v242, %v65
    %v259 = vmul.f32 %v243, %v66
    %v260 = vmul.f32 %v244, %v67
    %v261 = vmul.f32 %v245, %v68
    %v262 = vmul.f32 %v246, %v69
    %v263 = vmul.f32 %v247, %v70
    %v264 = vmul.f32 %v248, %v71
    %v265 = vmul.f32 %v249, %v72
    %v266 = vmul.f32 %v250, %v73
    %v267 = vmul.f32 %v251, %v74
    %v268 = vmul.f32 %v252, %v75
    %v269 = vmul.f32 %v186, %v76
    %v270 = vmul.f32 %v185, %v77
    %v271 = vmul.f32 %v184, %v78
    %v272 = vmul.f32 %v187, %v79
    %v273 = vld [vmem:[%s2] sm:$0xf]
    %v274 = vld [vmem:[%s3] sm:$0xf]
    %276 = vset.pattern.permute.xlu0 0
    %277 = vperm.xlu0 %276, %v274
    %v278 = vpop.permute.xlu0 %277
    %vm280 = vcmask 293888
    %v282 = vsel %vm280, %v273, 0
    %v285 = vsel %vm236, %v269, 0
    %v288 = vsel %vm236, %v270, 0
    %v291 = vsel %vm236, %v271, 0
    %v294 = vsel %vm236, %v272, 0
    %296 = vmatprep.subr.mxu0 %v254
    %297 = vmatpush1.msra.mxu0 %v253
    %298 = vmatprep.subr.mxu0 %v258
    %299 = vmatpush1.msra.mxu0 %v257
    %300 = vmatprep.subr.mxu0 %v262
    %301 = vmatpush1.msra.mxu0 %v261
    %302 = vmatprep.subr.mxu0 %v266
    %303 = vmatpush1.msra.mxu0 %v265
    %304 = vmatprep.subr.mxu0 %v288
    %305 = vmatpush1.msra.mxu0 %v285
    %306 = vmatprep.subr.mxu0 0.0
    %307 = vmatpush1.msra.mxu0 0.0
    %308 = vmatprep.subr.mxu0 0.0
    %309 = vmatpush1.msra.mxu0 0.0
    %310 = vmatprep.subr.mxu0 0.0
    %311 = vmatpush1.msra.mxu0 0.0
    %312 = vmatprep.subr.mxu0 0.0
    %313 = vmatpush1.msra.mxu0 0.0
    %314 = vmatprep.subr.mxu0 0.0
    %315 = vmatpush1.msra.mxu0 0.0
    %316 = vmatprep.subr.mxu0 0.0
    %317 = vmatpush1.msra.mxu0 0.0
    %318 = vmatprep.subr.mxu0 0.0
    %319 = vmatpush1.msra.mxu0 0.0
    %320 = vmatprep.subr.mxu0 0.0
    %321 = vmatpush1.msra.mxu0 0.0
    %322 = vmatprep.subr.mxu0 0.0
    %323 = vmatpush1.msra.mxu0 0.0
    %324 = vmatprep.subr.mxu0 0.0
    %325 = vmatpush1.msra.mxu0 0.0
    %326 = vmatprep.subr.mxu0 0.0
    %327 = vmatpush1.msra.mxu0 0.0
    %328 = vmatprep.subr.mxu0 0.0
    %329 = vmatpush1.msra.mxu0 0.0
    %330 = vmatprep.subr.mxu0 0.0
    %331 = vmatpush1.msra.mxu0 0.0
    %332 = vmatprep.subr.mxu0 0.0
    %333 = vmatpush1.msra.mxu0 0.0
    %334 = vmatprep.subr.mxu0 0.0
    %335 = vmatpush1.msra.mxu0 0.0
    %336 = vmatprep.subr.mxu0 0.0
    %337 = vmatpush1.msra.mxu0 0.0
    %338 = vmatprep.subr.mxu0 0.0
    %339 = vmatpush1.msra.mxu0 0.0
    %340 = vmatprep.subr.mxu0 0.0
    %341 = vmatpush1.msra.mxu0 0.0
    %342 = vmatprep.subr.mxu0 0.0
    %343 = vmatpush1.msra.mxu0 0.0
    %344 = vmatprep.subr.mxu0 0.0
    %345 = vmatpush1.msra.mxu0 0.0
    %346 = vmatprep.subr.mxu0 0.0
    %347 = vmatpush1.msra.mxu0 0.0
    %348 = vmatprep.subr.mxu0 0.0
    %349 = vmatpush1.msra.mxu0 0.0
    %350 = vmatprep.subr.mxu0 0.0
    %351 = vmatpush1.msra.mxu0 0.0
    %352 = vmatprep.subr.mxu0 0.0
    %353 = vmatpush1.msra.mxu0 0.0
    %354 = vmatprep.subr.mxu0 0.0
    %355 = vmatpush1.msra.mxu0 0.0
    %356 = vmatprep.subr.mxu0 0.0
    %357 = vmatpush1.msra.mxu0 0.0
    %358 = vmatprep.subr.mxu0 0.0
    %359 = vmatpush1.msra.mxu0 0.0
    %360 = vmatprep.mubr.f32.mxu0 0.0
    %361 = vmatmul.mubr.f32.gmra.mrb[0].mxu0 %v282
    %v362 = vpop.f32.mrb[0].mxu0
    %v363 = vadd.f32 %v278, %v362
    %v364 = vpop.f32.mrb[0].mxu0
    %v365 = vadd.f32 %v278, %v364
    %366 = vdwg.mxu0
    %367 = vmatprep.subr.mxu0 %v256
    %368 = vmatpush1.msra.mxu0 %v255
    %369 = vmatprep.subr.mxu0 %v260
    %370 = vmatpush1.msra.mxu0 %v259
    %371 = vmatprep.subr.mxu0 %v264
    %372 = vmatpush1.msra.mxu0 %v263
    %373 = vmatprep.subr.mxu0 %v268
    %374 = vmatpush1.msra.mxu0 %v267
    %375 = vmatprep.subr.mxu0 %v294
    %376 = vmatpush1.msra.mxu0 %v291
    %377 = vmatprep.subr.mxu0 0.0
    %378 = vmatpush1.msra.mxu0 0.0
    %379 = vmatprep.subr.mxu0 0.0
    %380 = vmatpush1.msra.mxu0 0.0
    %381 = vmatprep.subr.mxu0 0.0
    %382 = vmatpush1.msra.mxu0 0.0
    %383 = vmatprep.subr.mxu0 0.0
    %384 = vmatpush1.msra.mxu0 0.0
    %385 = vmatprep.subr.mxu0 0.0
    %386 = vmatpush1.msra.mxu0 0.0
    %387 = vmatprep.subr.mxu0 0.0
    %388 = vmatpush1.msra.mxu0 0.0
    %389 = vmatprep.subr.mxu0 0.0
    %390 = vmatpush1.msra.mxu0 0.0
    %391 = vmatprep.subr.mxu0 0.0
    %392 = vmatpush1.msra.mxu0 0.0
    %393 = vmatprep.subr.mxu0 0.0
    %394 = vmatpush1.msra.mxu0 0.0
    %395 = vmatprep.subr.mxu0 0.0
    %396 = vmatpush1.msra.mxu0 0.0
    %397 = vmatprep.subr.mxu0 0.0
    %398 = vmatpush1.msra.mxu0 0.0
    %399 = vmatprep.subr.mxu0 0.0
    %400 = vmatpush1.msra.mxu0 0.0
    %401 = vmatprep.subr.mxu0 0.0
    %402 = vmatpush1.msra.mxu0 0.0
    %403 = vmatprep.subr.mxu0 0.0
    %404 = vmatpush1.msra.mxu0 0.0
    %405 = vmatprep.subr.mxu0 0.0
    %406 = vmatpush1.msra.mxu0 0.0
    %407 = vmatprep.subr.mxu0 0.0
    %408 = vmatpush1.msra.mxu0 0.0
    %409 = vmatprep.subr.mxu0 0.0
    %410 = vmatpush1.msra.mxu0 0.0
    %411 = vmatprep.subr.mxu0 0.0
    %412 = vmatpush1.msra.mxu0 0.0
    %413 = vmatprep.subr.mxu0 0.0
    %414 = vmatpush1.msra.mxu0 0.0
    %415 = vmatprep.subr.mxu0 0.0
    %416 = vmatpush1.msra.mxu0 0.0
    %417 = vmatprep.subr.mxu0 0.0
    %418 = vmatpush1.msra.mxu0 0.0
    %419 = vmatprep.subr.mxu0 0.0
    %420 = vmatpush1.msra.mxu0 0.0
    %421 = vmatprep.subr.mxu0 0.0
    %422 = vmatpush1.msra.mxu0 0.0
    %423 = vmatprep.subr.mxu0 0.0
    %424 = vmatpush1.msra.mxu0 0.0
    %425 = vmatprep.subr.mxu0 0.0
    %426 = vmatpush1.msra.mxu0 0.0
    %427 = vmatprep.subr.mxu0 0.0
    %428 = vmatpush1.msra.mxu0 0.0
    %429 = vmatprep.subr.mxu0 0.0
    %430 = vmatpush1.msra.mxu0 0.0
    %431 = vmatprep.mubr.f32.mxu0 0.0
    %432 = vmatmul.mubr.f32.gmra.mrb[0].mxu0 %v282
    %v433 = vpop.f32.mrb[0].mxu0
    %v434 = vadd.f32 %v278, %v433
    %v435 = vpop.f32.mrb[0].mxu0
    %v436 = vadd.f32 %v278, %v435
    %437 = vdwg.mxu0
    %vm438 = vcmp.ge.f32.partialorder %v363, 0.0
    %vm439 = vcmp.ge.f32.partialorder %v365, 0.0
    %vm440 = vcmp.ge.f32.partialorder %v434, 0.0
    %vm441 = vcmp.ge.f32.partialorder %v436, 0.0
    %v442 = vstv %s81
    %v443 = vmul.f32 %v442, %v363
    %v444 = vmul.f32 %v442, %v365
    %v445 = vmul.f32 %v442, %v434
    %v446 = vmul.f32 %v442, %v436
    %v447 = vsel %vm438, %v363, %v443
    %v448 = vsel %vm439, %v365, %v444
    %v449 = vsel %vm440, %v434, %v445
    %v450 = vsel %vm441, %v436, %v446
    %451 = vrot.lane.b32.xlu0 %v447, 17
    %v452 = vpop.permute.xlu0 %451
    %453 = vrot.lane.b32.xlu0 %v448, 17
    %v454 = vpop.permute.xlu0 %453
    %455 = vrot.lane.b32.xlu0 %v449, 17
    %v456 = vpop.permute.xlu0 %455
    %457 = vrot.lane.b32.xlu0 %v450, 17
    %v458 = vpop.permute.xlu0 %457
    %v459 = vsel %vm92, %v456, %v458
    %v460 = vsel %vm92, %v454, %v456
    %v461 = vsel %vm92, %v452, %v454
    %v462 = vsel %vm92, %v458, %v452
    %463 = vrot.lane.b32.xlu0 %v447, 16
    %v464 = vpop.permute.xlu0 %463
    %465 = vrot.lane.b32.xlu0 %v448, 16
    %v466 = vpop.permute.xlu0 %465
    %467 = vrot.lane.b32.xlu0 %v449, 16
    %v468 = vpop.permute.xlu0 %467
    %469 = vrot.lane.b32.xlu0 %v450, 16
    %v470 = vpop.permute.xlu0 %469
    %v471 = vsel %vm105, %v468, %v470
    %v472 = vsel %vm105, %v466, %v468
    %v473 = vsel %vm105, %v464, %v466
    %v474 = vsel %vm105, %v470, %v464
    %475 = vrot.lane.b32.xlu0 %v447, 15
    %v476 = vpop.permute.xlu0 %475
    %477 = vrot.lane.b32.xlu0 %v448, 15
    %v478 = vpop.permute.xlu0 %477
    %479 = vrot.lane.b32.xlu0 %v449, 15
    %v480 = vpop.permute.xlu0 %479
    %481 = vrot.lane.b32.xlu0 %v450, 15
    %v482 = vpop.permute.xlu0 %481
    %v483 = vsel %vm118, %v480, %v482
    %v484 = vsel %vm118, %v478, %v480
    %v485 = vsel %vm118, %v476, %v478
    %v486 = vsel %vm118, %v482, %v476
    %487 = vrot.lane.b32.xlu0 %v447, 1
    %v488 = vpop.permute.xlu0 %487
    %489 = vrot.lane.b32.xlu0 %v448, 1
    %v490 = vpop.permute.xlu0 %489
    %491 = vrot.lane.b32.xlu0 %v449, 1
    %v492 = vpop.permute.xlu0 %491
    %493 = vrot.lane.b32.xlu0 %v450, 1
    %v494 = vpop.permute.xlu0 %493
    %v495 = vsel %vm131, %v492, %v494
    %v496 = vsel %vm131, %v490, %v492
    %v497 = vsel %vm131, %v488, %v490
    %v498 = vsel %vm131, %v494, %v488
    %499 = vrot.lane.b32.xlu0 %v447, 127
    %v500 = vpop.permute.xlu0 %499
    %501 = vrot.lane.b32.xlu0 %v448, 127
    %v502 = vpop.permute.xlu0 %501
    %503 = vrot.lane.b32.xlu0 %v449, 127
    %v504 = vpop.permute.xlu0 %503
    %505 = vrot.lane.b32.xlu0 %v450, 127
    %v506 = vpop.permute.xlu0 %505
    %v507 = vsel %vm144, %v504, %v506
    %v508 = vsel %vm144, %v502, %v504
    %v509 = vsel %vm144, %v500, %v502
    %v510 = vsel %vm144, %v506, %v500
    %511 = vrot.lane.b32.xlu0 %v447, 113
    %v512 = vpop.permute.xlu0 %511
    %513 = vrot.lane.b32.xlu0 %v448, 113
    %v514 = vpop.permute.xlu0 %513
    %515 = vrot.lane.b32.xlu0 %v449, 113
    %v516 = vpop.permute.xlu0 %515
    %517 = vrot.lane.b32.xlu0 %v450, 113
    %v518 = vpop.permute.xlu0 %517
    %v519 = vsel %vm157, %v516, %v518
    %v520 = vsel %vm157, %v514, %v516
    %v521 = vsel %vm157, %v512, %v514
    %v522 = vsel %vm157, %v518, %v512
    %523 = vrot.lane.b32.xlu0 %v447, 112
    %v524 = vpop.permute.xlu0 %523
    %525 = vrot.lane.b32.xlu0 %v448, 112
    %v526 = vpop.permute.xlu0 %525
    %527 = vrot.lane.b32.xlu0 %v449, 112
    %v528 = vpop.permute.xlu0 %527
    %529 = vrot.lane.b32.xlu0 %v450, 112
    %v530 = vpop.permute.xlu0 %529
    %v531 = vsel %vm170, %v528, %v530
    %v532 = vsel %vm170, %v526, %v528
    %v533 = vsel %vm170, %v524, %v526
    %v534 = vsel %vm170, %v530, %v524
    %535 = vrot.lane.b32.xlu0 %v447, 111
    %v536 = vpop.permute.xlu0 %535
    %537 = vrot.lane.b32.xlu0 %v448, 111
    %v538 = vpop.permute.xlu0 %537
    %539 = vrot.lane.b32.xlu0 %v449, 111
    %v540 = vpop.permute.xlu0 %539
    %541 = vrot.lane.b32.xlu0 %v450, 111
    %v542 = vpop.permute.xlu0 %541
    %v543 = vsel %vm183, %v540, %v542
    %v544 = vsel %vm183, %v538, %v540
    %v545 = vsel %vm183, %v536, %v538
    %v546 = vsel %vm183, %v542, %v536
    %v551 = vrot.slane %v474, 4
    %v552 = vrot.slane %v473, 4
    %v553 = vrot.slane %v472, 4
    %v554 = vrot.slane %v471, 4
    %v563 = vrot.slane %v498, 4
    %v564 = vrot.slane %v497, 4
    %v565 = vrot.slane %v496, 4
    %v566 = vrot.slane %v495, 4
    %v575 = vrot.slane %v509, 4
    %v576 = vrot.slane %v508, 4
    %v577 = vrot.slane %v507, 4
    %v578 = vrot.slane %v510, 4
    %v587 = vrot.slane %v533, 4
    %v588 = vrot.slane %v532, 4
    %v589 = vrot.slane %v531, 4
    %v590 = vrot.slane %v534, 4
    %v595 = vsel %vm236, %v462, %v551
    %v596 = vsel %vm236, %v461, %v552
    %v597 = vsel %vm236, %v460, %v553
    %v598 = vsel %vm236, %v459, %v554
    %v599 = vsel %vm236, %v486, %v563
    %v600 = vsel %vm236, %v485, %v564
    %v601 = vsel %vm236, %v484, %v565
    %v602 = vsel %vm236, %v483, %v566
    %v603 = vsel %vm236, %v447, %v575
    %v604 = vsel %vm236, %v448, %v576
    %v605 = vsel %vm236, %v449, %v577
    %v606 = vsel %vm236, %v450, %v578
    %v607 = vsel %vm236, %v521, %v587
    %v608 = vsel %vm236, %v520, %v588
    %v609 = vsel %vm236, %v519, %v589
    %v610 = vsel %vm236, %v522, %v590
    %v611 = vmul.f32 %v595, %v60
    %v612 = vmul.f32 %v596, %v61
    %v613 = vmul.f32 %v597, %v62
    %v614 = vmul.f32 %v598, %v63
    %v615 = vmul.f32 %v599, %v64
    %v616 = vmul.f32 %v600, %v65
    %v617 = vmul.f32 %v601, %v66
    %v618 = vmul.f32 %v602, %v67
    %v619 = vmul.f32 %v603, %v68
    %v620 = vmul.f32 %v604, %v69
    %v621 = vmul.f32 %v605, %v70
    %v622 = vmul.f32 %v606, %v71
    %v623 = vmul.f32 %v607, %v72
    %v624 = vmul.f32 %v608, %v73
    %v625 = vmul.f32 %v609, %v74
    %v626 = vmul.f32 %v610, %v75
    %v627 = vmul.f32 %v545, %v76
    %v628 = vmul.f32 %v544, %v77
    %v629 = vmul.f32 %v543, %v78
    %v630 = vmul.f32 %v546, %v79
    %s631 = scalar_lea.vmem %s2, 4
    %v632 = vld [vmem:[%s631] sm:$0xf]
    %s633 = scalar_lea.vmem %s3, 4
    %v634 = vld [vmem:[%s633] sm:$0xf]
    %636 = vset.pattern.permute.xlu0 0
    %637 = vperm.xlu0 %636, %v634
    %v638 = vpop.permute.xlu0 %637
    %v641 = vsel %vm280, %v632, 0
    %v644 = vsel %vm236, %v627, 0
    %v647 = vsel %vm236, %v628, 0
    %v650 = vsel %vm236, %v629, 0
    %v653 = vsel %vm236, %v630, 0
    %655 = vmatprep.subr.mxu0 %v612
    %656 = vmatpush1.msra.mxu0 %v611
    %657 = vmatprep.subr.mxu0 %v616
    %658 = vmatpush1.msra.mxu0 %v615
    %659 = vmatprep.subr.mxu0 %v620
    %660 = vmatpush1.msra.mxu0 %v619
    %661 = vmatprep.subr.mxu0 %v624
    %662 = vmatpush1.msra.mxu0 %v623
    %663 = vmatprep.subr.mxu0 %v647
    %664 = vmatpush1.msra.mxu0 %v644
    %665 = vmatprep.subr.mxu0 0.0
    %666 = vmatpush1.msra.mxu0 0.0
    %667 = vmatprep.subr.mxu0 0.0
    %668 = vmatpush1.msra.mxu0 0.0
    %669 = vmatprep.subr.mxu0 0.0
    %670 = vmatpush1.msra.mxu0 0.0
    %671 = vmatprep.subr.mxu0 0.0
    %672 = vmatpush1.msra.mxu0 0.0
    %673 = vmatprep.subr.mxu0 0.0
    %674 = vmatpush1.msra.mxu0 0.0
    %675 = vmatprep.subr.mxu0 0.0
    %676 = vmatpush1.msra.mxu0 0.0
    %677 = vmatprep.subr.mxu0 0.0
    %678 = vmatpush1.msra.mxu0 0.0
    %679 = vmatprep.subr.mxu0 0.0
    %680 = vmatpush1.msra.mxu0 0.0
    %681 = vmatprep.subr.mxu0 0.0
    %682 = vmatpush1.msra.mxu0 0.0
    %683 = vmatprep.subr.mxu0 0.0
    %684 = vmatpush1.msra.mxu0 0.0
    %685 = vmatprep.subr.mxu0 0.0
    %686 = vmatpush1.msra.mxu0 0.0
    %687 = vmatprep.subr.mxu0 0.0
    %688 = vmatpush1.msra.mxu0 0.0
    %689 = vmatprep.subr.mxu0 0.0
    %690 = vmatpush1.msra.mxu0 0.0
    %691 = vmatprep.subr.mxu0 0.0
    %692 = vmatpush1.msra.mxu0 0.0
    %693 = vmatprep.subr.mxu0 0.0
    %694 = vmatpush1.msra.mxu0 0.0
    %695 = vmatprep.subr.mxu0 0.0
    %696 = vmatpush1.msra.mxu0 0.0
    %697 = vmatprep.subr.mxu0 0.0
    %698 = vmatpush1.msra.mxu0 0.0
    %699 = vmatprep.subr.mxu0 0.0
    %700 = vmatpush1.msra.mxu0 0.0
    %701 = vmatprep.subr.mxu0 0.0
    %702 = vmatpush1.msra.mxu0 0.0
    %703 = vmatprep.subr.mxu0 0.0
    %704 = vmatpush1.msra.mxu0 0.0
    %705 = vmatprep.subr.mxu0 0.0
    %706 = vmatpush1.msra.mxu0 0.0
    %707 = vmatprep.subr.mxu0 0.0
    %708 = vmatpush1.msra.mxu0 0.0
    %709 = vmatprep.subr.mxu0 0.0
    %710 = vmatpush1.msra.mxu0 0.0
    %711 = vmatprep.subr.mxu0 0.0
    %712 = vmatpush1.msra.mxu0 0.0
    %713 = vmatprep.subr.mxu0 0.0
    %714 = vmatpush1.msra.mxu0 0.0
    %715 = vmatprep.subr.mxu0 0.0
    %716 = vmatpush1.msra.mxu0 0.0
    %717 = vmatprep.subr.mxu0 0.0
    %718 = vmatpush1.msra.mxu0 0.0
    %719 = vmatprep.mubr.f32.mxu0 0.0
    %720 = vmatmul.mubr.f32.gmra.mrb[0].mxu0 %v641
    %v721 = vpop.f32.mrb[0].mxu0
    %v722 = vadd.f32 %v638, %v721
    %v723 = vpop.f32.mrb[0].mxu0
    %v724 = vadd.f32 %v638, %v723
    %725 = vdwg.mxu0
    %726 = vmatprep.subr.mxu0 %v614
    %727 = vmatpush1.msra.mxu0 %v613
    %728 = vmatprep.subr.mxu0 %v618
    %729 = vmatpush1.msra.mxu0 %v617
    %730 = vmatprep.subr.mxu0 %v622
    %731 = vmatpush1.msra.mxu0 %v621
    %732 = vmatprep.subr.mxu0 %v626
    %733 = vmatpush1.msra.mxu0 %v625
    %734 = vmatprep.subr.mxu0 %v653
    %735 = vmatpush1.msra.mxu0 %v650
    %736 = vmatprep.subr.mxu0 0.0
    %737 = vmatpush1.msra.mxu0 0.0
    %738 = vmatprep.subr.mxu0 0.0
    %739 = vmatpush1.msra.mxu0 0.0
    %740 = vmatprep.subr.mxu0 0.0
    %741 = vmatpush1.msra.mxu0 0.0
    %742 = vmatprep.subr.mxu0 0.0
    %743 = vmatpush1.msra.mxu0 0.0
    %744 = vmatprep.subr.mxu0 0.0
    %745 = vmatpush1.msra.mxu0 0.0
    %746 = vmatprep.subr.mxu0 0.0
    %747 = vmatpush1.msra.mxu0 0.0
    %748 = vmatprep.subr.mxu0 0.0
    %749 = vmatpush1.msra.mxu0 0.0
    %750 = vmatprep.subr.mxu0 0.0
    %751 = vmatpush1.msra.mxu0 0.0
    %752 = vmatprep.subr.mxu0 0.0
    %753 = vmatpush1.msra.mxu0 0.0
    %754 = vmatprep.subr.mxu0 0.0
    %755 = vmatpush1.msra.mxu0 0.0
    %756 = vmatprep.subr.mxu0 0.0
    %757 = vmatpush1.msra.mxu0 0.0
    %758 = vmatprep.subr.mxu0 0.0
    %759 = vmatpush1.msra.mxu0 0.0
    %760 = vmatprep.subr.mxu0 0.0
    %761 = vmatpush1.msra.mxu0 0.0
    %762 = vmatprep.subr.mxu0 0.0
    %763 = vmatpush1.msra.mxu0 0.0
    %764 = vmatprep.subr.mxu0 0.0
    %765 = vmatpush1.msra.mxu0 0.0
    %766 = vmatprep.subr.mxu0 0.0
    %767 = vmatpush1.msra.mxu0 0.0
    %768 = vmatprep.subr.mxu0 0.0
    %769 = vmatpush1.msra.mxu0 0.0
    %770 = vmatprep.subr.mxu0 0.0
    %771 = vmatpush1.msra.mxu0 0.0
    %772 = vmatprep.subr.mxu0 0.0
    %773 = vmatpush1.msra.mxu0 0.0
    %774 = vmatprep.subr.mxu0 0.0
    %775 = vmatpush1.msra.mxu0 0.0
    %776 = vmatprep.subr.mxu0 0.0
    %777 = vmatpush1.msra.mxu0 0.0
    %778 = vmatprep.subr.mxu0 0.0
    %779 = vmatpush1.msra.mxu0 0.0
    %780 = vmatprep.subr.mxu0 0.0
    %781 = vmatpush1.msra.mxu0 0.0
    %782 = vmatprep.subr.mxu0 0.0
    %783 = vmatpush1.msra.mxu0 0.0
    %784 = vmatprep.subr.mxu0 0.0
    %785 = vmatpush1.msra.mxu0 0.0
    %786 = vmatprep.subr.mxu0 0.0
    %787 = vmatpush1.msra.mxu0 0.0
    %788 = vmatprep.subr.mxu0 0.0
    %789 = vmatpush1.msra.mxu0 0.0
    %790 = vmatprep.mubr.f32.mxu0 0.0
    %791 = vmatmul.mubr.f32.gmra.mrb[0].mxu0 %v641
    %v792 = vpop.f32.mrb[0].mxu0
    %v793 = vadd.f32 %v638, %v792
    %v794 = vpop.f32.mrb[0].mxu0
    %v795 = vadd.f32 %v638, %v794
    %796 = vdwg.mxu0
    %v797 = vadd.f32 %v722, %v51
    %v798 = vadd.f32 %v724, %v55
    %v799 = vadd.f32 %v793, %v53
    %v800 = vadd.f32 %v795, %v58
    %801 = vrot.lane.b32.xlu0 %v797, 17
    %v802 = vpop.permute.xlu0 %801
    %803 = vrot.lane.b32.xlu0 %v798, 17
    %v804 = vpop.permute.xlu0 %803
    %805 = vrot.lane.b32.xlu0 %v799, 17
    %v806 = vpop.permute.xlu0 %805
    %807 = vrot.lane.b32.xlu0 %v800, 17
    %v808 = vpop.permute.xlu0 %807
    %v809 = vsel %vm92, %v806, %v808
    %v810 = vsel %vm92, %v804, %v806
    %v811 = vsel %vm92, %v802, %v804
    %v812 = vsel %vm92, %v808, %v802
    %813 = vrot.lane.b32.xlu0 %v797, 16
    %v814 = vpop.permute.xlu0 %813
    %815 = vrot.lane.b32.xlu0 %v798, 16
    %v816 = vpop.permute.xlu0 %815
    %817 = vrot.lane.b32.xlu0 %v799, 16
    %v818 = vpop.permute.xlu0 %817
    %819 = vrot.lane.b32.xlu0 %v800, 16
    %v820 = vpop.permute.xlu0 %819
    %v821 = vsel %vm105, %v818, %v820
    %v822 = vsel %vm105, %v816, %v818
    %v823 = vsel %vm105, %v814, %v816
    %v824 = vsel %vm105, %v820, %v814
    %825 = vrot.lane.b32.xlu0 %v797, 15
    %v826 = vpop.permute.xlu0 %825
    %827 = vrot.lane.b32.xlu0 %v798, 15
    %v828 = vpop.permute.xlu0 %827
    %829 = vrot.lane.b32.xlu0 %v799, 15
    %v830 = vpop.permute.xlu0 %829
    %831 = vrot.lane.b32.xlu0 %v800, 15
    %v832 = vpop.permute.xlu0 %831
    %v833 = vsel %vm118, %v830, %v832
    %v834 = vsel %vm118, %v828, %v830
    %v835 = vsel %vm118, %v826, %v828
    %v836 = vsel %vm118, %v832, %v826
    %837 = vrot.lane.b32.xlu0 %v797, 1
    %v838 = vpop.permute.xlu0 %837
    %839 = vrot.lane.b32.xlu0 %v798, 1
    %v840 = vpop.permute.xlu0 %839
    %841 = vrot.lane.b32.xlu0 %v799, 1
    %v842 = vpop.permute.xlu0 %841
    %843 = vrot.lane.b32.xlu0 %v800, 1
    %v844 = vpop.permute.xlu0 %843
    %v845 = vsel %vm131, %v842, %v844
    %v846 = vsel %vm131, %v840, %v842
    %v847 = vsel %vm131, %v838, %v840
    %v848 = vsel %vm131, %v844, %v838
    %849 = vrot.lane.b32.xlu0 %v797, 127
    %v850 = vpop.permute.xlu0 %849
    %851 = vrot.lane.b32.xlu0 %v798, 127
    %v852 = vpop.permute.xlu0 %851
    %853 = vrot.lane.b32.xlu0 %v799, 127
    %v854 = vpop.permute.xlu0 %853
    %855 = vrot.lane.b32.xlu0 %v800, 127
    %v856 = vpop.permute.xlu0 %855
    %v857 = vsel %vm144, %v854, %v856
    %v858 = vsel %vm144, %v852, %v854
    %v859 = vsel %vm144, %v850, %v852
    %v860 = vsel %vm144, %v856, %v850
    %861 = vrot.lane.b32.xlu0 %v797, 113
    %v862 = vpop.permute.xlu0 %861
    %863 = vrot.lane.b32.xlu0 %v798, 113
    %v864 = vpop.permute.xlu0 %863
    %865 = vrot.lane.b32.xlu0 %v799, 113
    %v866 = vpop.permute.xlu0 %865
    %867 = vrot.lane.b32.xlu0 %v800, 113
    %v868 = vpop.permute.xlu0 %867
    %v869 = vsel %vm157, %v866, %v868
    %v870 = vsel %vm157, %v864, %v866
    %v871 = vsel %vm157, %v862, %v864
    %v872 = vsel %vm157, %v868, %v862
    %873 = vrot.lane.b32.xlu0 %v797, 112
    %v874 = vpop.permute.xlu0 %873
    %875 = vrot.lane.b32.xlu0 %v798, 112
    %v876 = vpop.permute.xlu0 %875
    %877 = vrot.lane.b32.xlu0 %v799, 112
    %v878 = vpop.permute.xlu0 %877
    %879 = vrot.lane.b32.xlu0 %v800, 112
    %v880 = vpop.permute.xlu0 %879
    %v881 = vsel %vm170, %v878, %v880
    %v882 = vsel %vm170, %v876, %v878
    %v883 = vsel %vm170, %v874, %v876
    %v884 = vsel %vm170, %v880, %v874
    %885 = vrot.lane.b32.xlu0 %v797, 111
    %v886 = vpop.permute.xlu0 %885
    %887 = vrot.lane.b32.xlu0 %v798, 111
    %v888 = vpop.permute.xlu0 %887
    %889 = vrot.lane.b32.xlu0 %v799, 111
    %v890 = vpop.permute.xlu0 %889
    %891 = vrot.lane.b32.xlu0 %v800, 111
    %v892 = vpop.permute.xlu0 %891
    %v893 = vsel %vm183, %v890, %v892
    %v894 = vsel %vm183, %v888, %v890
    %v895 = vsel %vm183, %v886, %v888
    %v896 = vsel %vm183, %v892, %v886
    %v901 = vrot.slane %v824, 4
    %v902 = vrot.slane %v823, 4
    %v903 = vrot.slane %v822, 4
    %v904 = vrot.slane %v821, 4
    %v913 = vrot.slane %v848, 4
    %v914 = vrot.slane %v847, 4
    %v915 = vrot.slane %v846, 4
    %v916 = vrot.slane %v845, 4
    %v925 = vrot.slane %v859, 4
    %v926 = vrot.slane %v858, 4
    %v927 = vrot.slane %v857, 4
    %v928 = vrot.slane %v860, 4
    %v937 = vrot.slane %v883, 4
    %v938 = vrot.slane %v882, 4
    %v939 = vrot.slane %v881, 4
    %v940 = vrot.slane %v884, 4
    %v945 = vsel %vm236, %v812, %v901
    %v946 = vsel %vm236, %v811, %v902
    %v947 = vsel %vm236, %v810, %v903
    %v948 = vsel %vm236, %v809, %v904
    %v949 = vsel %vm236, %v836, %v913
    %v950 = vsel %vm236, %v835, %v914
    %v951 = vsel %vm236, %v834, %v915
    %v952 = vsel %vm236, %v833, %v916
    %v953 = vsel %vm236, %v797, %v925
    %v954 = vsel %vm236, %v798, %v926
    %v955 = vsel %vm236, %v799, %v927
    %v956 = vsel %vm236, %v800, %v928
    %v957 = vsel %vm236, %v871, %v937
    %v958 = vsel %vm236, %v870, %v938
    %v959 = vsel %vm236, %v869, %v939
    %v960 = vsel %vm236, %v872, %v940
    %v961 = vmul.f32 %v945, %v60
    %v962 = vmul.f32 %v946, %v61
    %v963 = vmul.f32 %v947, %v62
    %v964 = vmul.f32 %v948, %v63
    %v965 = vmul.f32 %v949, %v64
    %v966 = vmul.f32 %v950, %v65
    %v967 = vmul.f32 %v951, %v66
    %v968 = vmul.f32 %v952, %v67
    %v969 = vmul.f32 %v953, %v68
    %v970 = vmul.f32 %v954, %v69
    %v971 = vmul.f32 %v955, %v70
    %v972 = vmul.f32 %v956, %v71
    %v973 = vmul.f32 %v957, %v72
    %v974 = vmul.f32 %v958, %v73
    %v975 = vmul.f32 %v959, %v74
    %v976 = vmul.f32 %v960, %v75
    %v977 = vmul.f32 %v895, %v76
    %v978 = vmul.f32 %v894, %v77
    %v979 = vmul.f32 %v893, %v78
    %v980 = vmul.f32 %v896, %v79
    %s981 = scalar_lea.vmem %s2, 8
    %v982 = vld [vmem:[%s981] sm:$0xf]
    %s983 = scalar_lea.vmem %s3, 8
    %v984 = vld [vmem:[%s983] sm:$0xf]
    %986 = vset.pattern.permute.xlu0 0
    %987 = vperm.xlu0 %986, %v984
    %v988 = vpop.permute.xlu0 %987
    %v991 = vsel %vm280, %v982, 0
    %v994 = vsel %vm236, %v977, 0
    %v997 = vsel %vm236, %v978, 0
    %v1000 = vsel %vm236, %v979, 0
    %v1003 = vsel %vm236, %v980, 0
    %1005 = vmatprep.subr.mxu0 %v962
    %1006 = vmatpush1.msra.mxu0 %v961
    %1007 = vmatprep.subr.mxu0 %v966
    %1008 = vmatpush1.msra.mxu0 %v965
    %1009 = vmatprep.subr.mxu0 %v970
    %1010 = vmatpush1.msra.mxu0 %v969
    %1011 = vmatprep.subr.mxu0 %v974
    %1012 = vmatpush1.msra.mxu0 %v973
    %1013 = vmatprep.subr.mxu0 %v997
    %1014 = vmatpush1.msra.mxu0 %v994
    %1015 = vmatprep.subr.mxu0 0.0
    %1016 = vmatpush1.msra.mxu0 0.0
    %1017 = vmatprep.subr.mxu0 0.0
    %1018 = vmatpush1.msra.mxu0 0.0
    %1019 = vmatprep.subr.mxu0 0.0
    %1020 = vmatpush1.msra.mxu0 0.0
    %1021 = vmatprep.subr.mxu0 0.0
    %1022 = vmatpush1.msra.mxu0 0.0
    %1023 = vmatprep.subr.mxu0 0.0
    %1024 = vmatpush1.msra.mxu0 0.0
    %1025 = vmatprep.subr.mxu0 0.0
    %1026 = vmatpush1.msra.mxu0 0.0
    %1027 = vmatprep.subr.mxu0 0.0
    %1028 = vmatpush1.msra.mxu0 0.0
    %1029 = vmatprep.subr.mxu0 0.0
    %1030 = vmatpush1.msra.mxu0 0.0
    %1031 = vmatprep.subr.mxu0 0.0
    %1032 = vmatpush1.msra.mxu0 0.0
    %1033 = vmatprep.subr.mxu0 0.0
    %1034 = vmatpush1.msra.mxu0 0.0
    %1035 = vmatprep.subr.mxu0 0.0
    %1036 = vmatpush1.msra.mxu0 0.0
    %1037 = vmatprep.subr.mxu0 0.0
    %1038 = vmatpush1.msra.mxu0 0.0
    %1039 = vmatprep.subr.mxu0 0.0
    %1040 = vmatpush1.msra.mxu0 0.0
    %1041 = vmatprep.subr.mxu0 0.0
    %1042 = vmatpush1.msra.mxu0 0.0
    %1043 = vmatprep.subr.mxu0 0.0
    %1044 = vmatpush1.msra.mxu0 0.0
    %1045 = vmatprep.subr.mxu0 0.0
    %1046 = vmatpush1.msra.mxu0 0.0
    %1047 = vmatprep.subr.mxu0 0.0
    %1048 = vmatpush1.msra.mxu0 0.0
    %1049 = vmatprep.subr.mxu0 0.0
    %1050 = vmatpush1.msra.mxu0 0.0
    %1051 = vmatprep.subr.mxu0 0.0
    %1052 = vmatpush1.msra.mxu0 0.0
    %1053 = vmatprep.subr.mxu0 0.0
    %1054 = vmatpush1.msra.mxu0 0.0
    %1055 = vmatprep.subr.mxu0 0.0
    %1056 = vmatpush1.msra.mxu0 0.0
    %1057 = vmatprep.subr.mxu0 0.0
    %1058 = vmatpush1.msra.mxu0 0.0
    %1059 = vmatprep.subr.mxu0 0.0
    %1060 = vmatpush1.msra.mxu0 0.0
    %1061 = vmatprep.subr.mxu0 0.0
    %1062 = vmatpush1.msra.mxu0 0.0
    %1063 = vmatprep.subr.mxu0 0.0
    %1064 = vmatpush1.msra.mxu0 0.0
    %1065 = vmatprep.subr.mxu0 0.0
    %1066 = vmatpush1.msra.mxu0 0.0
    %1067 = vmatprep.subr.mxu0 0.0
    %1068 = vmatpush1.msra.mxu0 0.0
    %1069 = vmatprep.mubr.f32.mxu0 0.0
    %1070 = vmatmul.mubr.f32.gmra.mrb[0].mxu0 %v991
    %v1071 = vpop.f32.mrb[0].mxu0
    %v1072 = vadd.f32 %v988, %v1071
    %v1073 = vpop.f32.mrb[0].mxu0
    %v1074 = vadd.f32 %v988, %v1073
    %1075 = vdwg.mxu0
    %1076 = vmatprep.subr.mxu0 %v964
    %1077 = vmatpush1.msra.mxu0 %v963
    %1078 = vmatprep.subr.mxu0 %v968
    %1079 = vmatpush1.msra.mxu0 %v967
    %1080 = vmatprep.subr.mxu0 %v972
    %1081 = vmatpush1.msra.mxu0 %v971
    %1082 = vmatprep.subr.mxu0 %v976
    %1083 = vmatpush1.msra.mxu0 %v975
    %1084 = vmatprep.subr.mxu0 %v1003
    %1085 = vmatpush1.msra.mxu0 %v1000
    %1086 = vmatprep.subr.mxu0 0.0
    %1087 = vmatpush1.msra.mxu0 0.0
    %1088 = vmatprep.subr.mxu0 0.0
    %1089 = vmatpush1.msra.mxu0 0.0
    %1090 = vmatprep.subr.mxu0 0.0
    %1091 = vmatpush1.msra.mxu0 0.0
    %1092 = vmatprep.subr.mxu0 0.0
    %1093 = vmatpush1.msra.mxu0 0.0
    %1094 = vmatprep.subr.mxu0 0.0
    %1095 = vmatpush1.msra.mxu0 0.0
    %1096 = vmatprep.subr.mxu0 0.0
    %1097 = vmatpush1.msra.mxu0 0.0
    %1098 = vmatprep.subr.mxu0 0.0
    %1099 = vmatpush1.msra.mxu0 0.0
    %1100 = vmatprep.subr.mxu0 0.0
    %1101 = vmatpush1.msra.mxu0 0.0
    %1102 = vmatprep.subr.mxu0 0.0
    %1103 = vmatpush1.msra.mxu0 0.0
    %1104 = vmatprep.subr.mxu0 0.0
    %1105 = vmatpush1.msra.mxu0 0.0
    %1106 = vmatprep.subr.mxu0 0.0
    %1107 = vmatpush1.msra.mxu0 0.0
    %1108 = vmatprep.subr.mxu0 0.0
    %1109 = vmatpush1.msra.mxu0 0.0
    %1110 = vmatprep.subr.mxu0 0.0
    %1111 = vmatpush1.msra.mxu0 0.0
    %1112 = vmatprep.subr.mxu0 0.0
    %1113 = vmatpush1.msra.mxu0 0.0
    %1114 = vmatprep.subr.mxu0 0.0
    %1115 = vmatpush1.msra.mxu0 0.0
    %1116 = vmatprep.subr.mxu0 0.0
    %1117 = vmatpush1.msra.mxu0 0.0
    %1118 = vmatprep.subr.mxu0 0.0
    %1119 = vmatpush1.msra.mxu0 0.0
    %1120 = vmatprep.subr.mxu0 0.0
    %1121 = vmatpush1.msra.mxu0 0.0
    %1122 = vmatprep.subr.mxu0 0.0
    %1123 = vmatpush1.msra.mxu0 0.0
    %1124 = vmatprep.subr.mxu0 0.0
    %1125 = vmatpush1.msra.mxu0 0.0
    %1126 = vmatprep.subr.mxu0 0.0
    %1127 = vmatpush1.msra.mxu0 0.0
    %1128 = vmatprep.subr.mxu0 0.0
    %1129 = vmatpush1.msra.mxu0 0.0
    %1130 = vmatprep.subr.mxu0 0.0
    %1131 = vmatpush1.msra.mxu0 0.0
    %1132 = vmatprep.subr.mxu0 0.0
    %1133 = vmatpush1.msra.mxu0 0.0
    %1134 = vmatprep.subr.mxu0 0.0
    %1135 = vmatpush1.msra.mxu0 0.0
    %1136 = vmatprep.subr.mxu0 0.0
    %1137 = vmatpush1.msra.mxu0 0.0
    %1138 = vmatprep.subr.mxu0 0.0
    %1139 = vmatpush1.msra.mxu0 0.0
    %1140 = vmatprep.mubr.f32.mxu0 0.0
    %1141 = vmatmul.mubr.f32.gmra.mrb[0].mxu0 %v991
    %v1142 = vpop.f32.mrb[0].mxu0
    %v1143 = vadd.f32 %v988, %v1142
    %v1144 = vpop.f32.mrb[0].mxu0
    %v1145 = vadd.f32 %v988, %v1144
    %1146 = vdwg.mxu0
    %vm1147 = vcmp.ge.f32.partialorder %v1072, 0.0
    %vm1148 = vcmp.ge.f32.partialorder %v1074, 0.0
    %vm1149 = vcmp.ge.f32.partialorder %v1143, 0.0
    %vm1150 = vcmp.ge.f32.partialorder %v1145, 0.0
    %v1151 = vmul.f32 %v442, %v1072
    %v1152 = vmul.f32 %v442, %v1074
    %v1153 = vmul.f32 %v442, %v1143
    %v1154 = vmul.f32 %v442, %v1145
    %v1155 = vsel %vm1147, %v1072, %v1151
    %v1156 = vsel %vm1148, %v1074, %v1152
    %v1157 = vsel %vm1149, %v1143, %v1153
    %v1158 = vsel %vm1150, %v1145, %v1154
    %1159 = vrot.lane.b32.xlu0 %v1155, 17
    %v1160 = vpop.permute.xlu0 %1159
    %1161 = vrot.lane.b32.xlu0 %v1156, 17
    %v1162 = vpop.permute.xlu0 %1161
    %1163 = vrot.lane.b32.xlu0 %v1157, 17
    %v1164 = vpop.permute.xlu0 %1163
    %1165 = vrot.lane.b32.xlu0 %v1158, 17
    %v1166 = vpop.permute.xlu0 %1165
    %v1167 = vsel %vm92, %v1164, %v1166
    %v1168 = vsel %vm92, %v1162, %v1164
    %v1169 = vsel %vm92, %v1160, %v1162
    %v1170 = vsel %vm92, %v1166, %v1160
    %1171 = vrot.lane.b32.xlu0 %v1155, 16
    %v1172 = vpop.permute.xlu0 %1171
    %1173 = vrot.lane.b32.xlu0 %v1156, 16
    %v1174 = vpop.permute.xlu0 %1173
    %1175 = vrot.lane.b32.xlu0 %v1157, 16
    %v1176 = vpop.permute.xlu0 %1175
    %1177 = vrot.lane.b32.xlu0 %v1158, 16
    %v1178 = vpop.permute.xlu0 %1177
    %v1179 = vsel %vm105, %v1176, %v1178
    %v1180 = vsel %vm105, %v1174, %v1176
    %v1181 = vsel %vm105, %v1172, %v1174
    %v1182 = vsel %vm105, %v1178, %v1172
    %1183 = vrot.lane.b32.xlu0 %v1155, 15
    %v1184 = vpop.permute.xlu0 %1183
    %1185 = vrot.lane.b32.xlu0 %v1156, 15
    %v1186 = vpop.permute.xlu0 %1185
    %1187 = vrot.lane.b32.xlu0 %v1157, 15
    %v1188 = vpop.permute.xlu0 %1187
    %1189 = vrot.lane.b32.xlu0 %v1158, 15
    %v1190 = vpop.permute.xlu0 %1189
    %v1191 = vsel %vm118, %v1188, %v1190
    %v1192 = vsel %vm118, %v1186, %v1188
    %v1193 = vsel %vm118, %v1184, %v1186
    %v1194 = vsel %vm118, %v1190, %v1184
    %1195 = vrot.lane.b32.xlu0 %v1155, 1
    %v1196 = vpop.permute.xlu0 %1195
    %1197 = vrot.lane.b32.xlu0 %v1156, 1
    %v1198 = vpop.permute.xlu0 %1197
    %1199 = vrot.lane.b32.xlu0 %v1157, 1
    %v1200 = vpop.permute.xlu0 %1199
    %1201 = vrot.lane.b32.xlu0 %v1158, 1
    %v1202 = vpop.permute.xlu0 %1201
    %v1203 = vsel %vm131, %v1200, %v1202
    %v1204 = vsel %vm131, %v1198, %v1200
    %v1205 = vsel %vm131, %v1196, %v1198
    %v1206 = vsel %vm131, %v1202, %v1196
    %1207 = vrot.lane.b32.xlu0 %v1155, 127
    %v1208 = vpop.permute.xlu0 %1207
    %1209 = vrot.lane.b32.xlu0 %v1156, 127
    %v1210 = vpop.permute.xlu0 %1209
    %1211 = vrot.lane.b32.xlu0 %v1157, 127
    %v1212 = vpop.permute.xlu0 %1211
    %1213 = vrot.lane.b32.xlu0 %v1158, 127
    %v1214 = vpop.permute.xlu0 %1213
    %v1215 = vsel %vm144, %v1212, %v1214
    %v1216 = vsel %vm144, %v1210, %v1212
    %v1217 = vsel %vm144, %v1208, %v1210
    %v1218 = vsel %vm144, %v1214, %v1208
    %1219 = vrot.lane.b32.xlu0 %v1155, 113
    %v1220 = vpop.permute.xlu0 %1219
    %1221 = vrot.lane.b32.xlu0 %v1156, 113
    %v1222 = vpop.permute.xlu0 %1221
    %1223 = vrot.lane.b32.xlu0 %v1157, 113
    %v1224 = vpop.permute.xlu0 %1223
    %1225 = vrot.lane.b32.xlu0 %v1158, 113
    %v1226 = vpop.permute.xlu0 %1225
    %v1227 = vsel %vm157, %v1224, %v1226
    %v1228 = vsel %vm157, %v1222, %v1224
    %v1229 = vsel %vm157, %v1220, %v1222
    %v1230 = vsel %vm157, %v1226, %v1220
    %1231 = vrot.lane.b32.xlu0 %v1155, 112
    %v1232 = vpop.permute.xlu0 %1231
    %1233 = vrot.lane.b32.xlu0 %v1156, 112
    %v1234 = vpop.permute.xlu0 %1233
    %1235 = vrot.lane.b32.xlu0 %v1157, 112
    %v1236 = vpop.permute.xlu0 %1235
    %1237 = vrot.lane.b32.xlu0 %v1158, 112
    %v1238 = vpop.permute.xlu0 %1237
    %v1239 = vsel %vm170, %v1236, %v1238
    %v1240 = vsel %vm170, %v1234, %v1236
    %v1241 = vsel %vm170, %v1232, %v1234
    %v1242 = vsel %vm170, %v1238, %v1232
    %1243 = vrot.lane.b32.xlu0 %v1155, 111
    %v1244 = vpop.permute.xlu0 %1243
    %1245 = vrot.lane.b32.xlu0 %v1156, 111
    %v1246 = vpop.permute.xlu0 %1245
    %1247 = vrot.lane.b32.xlu0 %v1157, 111
    %v1248 = vpop.permute.xlu0 %1247
    %1249 = vrot.lane.b32.xlu0 %v1158, 111
    %v1250 = vpop.permute.xlu0 %1249
    %v1251 = vsel %vm183, %v1248, %v1250
    %v1252 = vsel %vm183, %v1246, %v1248
    %v1253 = vsel %vm183, %v1244, %v1246
    %v1254 = vsel %vm183, %v1250, %v1244
    %v1259 = vrot.slane %v1182, 4
    %v1260 = vrot.slane %v1181, 4
    %v1261 = vrot.slane %v1180, 4
    %v1262 = vrot.slane %v1179, 4
    %v1271 = vrot.slane %v1206, 4
    %v1272 = vrot.slane %v1205, 4
    %v1273 = vrot.slane %v1204, 4
    %v1274 = vrot.slane %v1203, 4
    %v1283 = vrot.slane %v1217, 4
    %v1284 = vrot.slane %v1216, 4
    %v1285 = vrot.slane %v1215, 4
    %v1286 = vrot.slane %v1218, 4
    %v1295 = vrot.slane %v1241, 4
    %v1296 = vrot.slane %v1240, 4
    %v1297 = vrot.slane %v1239, 4
    %v1298 = vrot.slane %v1242, 4
    %v1303 = vsel %vm236, %v1170, %v1259
    %v1304 = vsel %vm236, %v1169, %v1260
    %v1305 = vsel %vm236, %v1168, %v1261
    %v1306 = vsel %vm236, %v1167, %v1262
    %v1307 = vsel %vm236, %v1194, %v1271
    %v1308 = vsel %vm236, %v1193, %v1272
    %v1309 = vsel %vm236, %v1192, %v1273
    %v1310 = vsel %vm236, %v1191, %v1274
    %v1311 = vsel %vm236, %v1155, %v1283
    %v1312 = vsel %vm236, %v1156, %v1284
    %v1313 = vsel %vm236, %v1157, %v1285
    %v1314 = vsel %vm236, %v1158, %v1286
    %v1315 = vsel %vm236, %v1229, %v1295
    %v1316 = vsel %vm236, %v1228, %v1296
    %v1317 = vsel %vm236, %v1227, %v1297
    %v1318 = vsel %vm236, %v1230, %v1298
    %v1319 = vmul.f32 %v1303, %v60
    %v1320 = vmul.f32 %v1304, %v61
    %v1321 = vmul.f32 %v1305, %v62
    %v1322 = vmul.f32 %v1306, %v63
    %v1323 = vmul.f32 %v1307, %v64
    %v1324 = vmul.f32 %v1308, %v65
    %v1325 = vmul.f32 %v1309, %v66
    %v1326 = vmul.f32 %v1310, %v67
    %v1327 = vmul.f32 %v1311, %v68
    %v1328 = vmul.f32 %v1312, %v69
    %v1329 = vmul.f32 %v1313, %v70
    %v1330 = vmul.f32 %v1314, %v71
    %v1331 = vmul.f32 %v1315, %v72
    %v1332 = vmul.f32 %v1316, %v73
    %v1333 = vmul.f32 %v1317, %v74
    %v1334 = vmul.f32 %v1318, %v75
    %v1335 = vmul.f32 %v1253, %v76
    %v1336 = vmul.f32 %v1252, %v77
    %v1337 = vmul.f32 %v1251, %v78
    %v1338 = vmul.f32 %v1254, %v79
    %s1339 = scalar_lea.vmem %s2, 12
    %v1340 = vld [vmem:[%s1339] sm:$0xf]
    %s1341 = scalar_lea.vmem %s3, 12
    %v1342 = vld [vmem:[%s1341] sm:$0xf]
    %1344 = vset.pattern.permute.xlu0 0
    %1345 = vperm.xlu0 %1344, %v1342
    %v1346 = vpop.permute.xlu0 %1345
    %v1349 = vsel %vm280, %v1340, 0
    %v1352 = vsel %vm236, %v1335, 0
    %v1355 = vsel %vm236, %v1336, 0
    %v1358 = vsel %vm236, %v1337, 0
    %v1361 = vsel %vm236, %v1338, 0
    %1363 = vmatprep.subr.mxu0 %v1320
    %1364 = vmatpush1.msra.mxu0 %v1319
    %1365 = vmatprep.subr.mxu0 %v1324
    %1366 = vmatpush1.msra.mxu0 %v1323
    %1367 = vmatprep.subr.mxu0 %v1328
    %1368 = vmatpush1.msra.mxu0 %v1327
    %1369 = vmatprep.subr.mxu0 %v1332
    %1370 = vmatpush1.msra.mxu0 %v1331
    %1371 = vmatprep.subr.mxu0 %v1355
    %1372 = vmatpush1.msra.mxu0 %v1352
    %1373 = vmatprep.subr.mxu0 0.0
    %1374 = vmatpush1.msra.mxu0 0.0
    %1375 = vmatprep.subr.mxu0 0.0
    %1376 = vmatpush1.msra.mxu0 0.0
    %1377 = vmatprep.subr.mxu0 0.0
    %1378 = vmatpush1.msra.mxu0 0.0
    %1379 = vmatprep.subr.mxu0 0.0
    %1380 = vmatpush1.msra.mxu0 0.0
    %1381 = vmatprep.subr.mxu0 0.0
    %1382 = vmatpush1.msra.mxu0 0.0
    %1383 = vmatprep.subr.mxu0 0.0
    %1384 = vmatpush1.msra.mxu0 0.0
    %1385 = vmatprep.subr.mxu0 0.0
    %1386 = vmatpush1.msra.mxu0 0.0
    %1387 = vmatprep.subr.mxu0 0.0
    %1388 = vmatpush1.msra.mxu0 0.0
    %1389 = vmatprep.subr.mxu0 0.0
    %1390 = vmatpush1.msra.mxu0 0.0
    %1391 = vmatprep.subr.mxu0 0.0
    %1392 = vmatpush1.msra.mxu0 0.0
    %1393 = vmatprep.subr.mxu0 0.0
    %1394 = vmatpush1.msra.mxu0 0.0
    %1395 = vmatprep.subr.mxu0 0.0
    %1396 = vmatpush1.msra.mxu0 0.0
    %1397 = vmatprep.subr.mxu0 0.0
    %1398 = vmatpush1.msra.mxu0 0.0
    %1399 = vmatprep.subr.mxu0 0.0
    %1400 = vmatpush1.msra.mxu0 0.0
    %1401 = vmatprep.subr.mxu0 0.0
    %1402 = vmatpush1.msra.mxu0 0.0
    %1403 = vmatprep.subr.mxu0 0.0
    %1404 = vmatpush1.msra.mxu0 0.0
    %1405 = vmatprep.subr.mxu0 0.0
    %1406 = vmatpush1.msra.mxu0 0.0
    %1407 = vmatprep.subr.mxu0 0.0
    %1408 = vmatpush1.msra.mxu0 0.0
    %1409 = vmatprep.subr.mxu0 0.0
    %1410 = vmatpush1.msra.mxu0 0.0
    %1411 = vmatprep.subr.mxu0 0.0
    %1412 = vmatpush1.msra.mxu0 0.0
    %1413 = vmatprep.subr.mxu0 0.0
    %1414 = vmatpush1.msra.mxu0 0.0
    %1415 = vmatprep.subr.mxu0 0.0
    %1416 = vmatpush1.msra.mxu0 0.0
    %1417 = vmatprep.subr.mxu0 0.0
    %1418 = vmatpush1.msra.mxu0 0.0
    %1419 = vmatprep.subr.mxu0 0.0
    %1420 = vmatpush1.msra.mxu0 0.0
    %1421 = vmatprep.subr.mxu0 0.0
    %1422 = vmatpush1.msra.mxu0 0.0
    %1423 = vmatprep.subr.mxu0 0.0
    %1424 = vmatpush1.msra.mxu0 0.0
    %1425 = vmatprep.subr.mxu0 0.0
    %1426 = vmatpush1.msra.mxu0 0.0
    %1427 = vmatprep.mubr.f32.mxu0 0.0
    %1428 = vmatmul.mubr.f32.gmra.mrb[0].mxu0 %v1349
    %v1429 = vpop.f32.mrb[0].mxu0
    %v1430 = vadd.f32 %v1346, %v1429
    %v1431 = vpop.f32.mrb[0].mxu0
    %v1432 = vadd.f32 %v1346, %v1431
    %1433 = vdwg.mxu0
    %1434 = vmatprep.subr.mxu0 %v1322
    %1435 = vmatpush1.msra.mxu0 %v1321
    %1436 = vmatprep.subr.mxu0 %v1326
    %1437 = vmatpush1.msra.mxu0 %v1325
    %1438 = vmatprep.subr.mxu0 %v1330
    %1439 = vmatpush1.msra.mxu0 %v1329
    %1440 = vmatprep.subr.mxu0 %v1334
    %1441 = vmatpush1.msra.mxu0 %v1333
    %1442 = vmatprep.subr.mxu0 %v1361
    %1443 = vmatpush1.msra.mxu0 %v1358
    %1444 = vmatprep.subr.mxu0 0.0
    %1445 = vmatpush1.msra.mxu0 0.0
    %1446 = vmatprep.subr.mxu0 0.0
    %1447 = vmatpush1.msra.mxu0 0.0
    %1448 = vmatprep.subr.mxu0 0.0
    %1449 = vmatpush1.msra.mxu0 0.0
    %1450 = vmatprep.subr.mxu0 0.0
    %1451 = vmatpush1.msra.mxu0 0.0
    %1452 = vmatprep.subr.mxu0 0.0
    %1453 = vmatpush1.msra.mxu0 0.0
    %1454 = vmatprep.subr.mxu0 0.0
    %1455 = vmatpush1.msra.mxu0 0.0
    %1456 = vmatprep.subr.mxu0 0.0
    %1457 = vmatpush1.msra.mxu0 0.0
    %1458 = vmatprep.subr.mxu0 0.0
    %1459 = vmatpush1.msra.mxu0 0.0
    %1460 = vmatprep.subr.mxu0 0.0
    %1461 = vmatpush1.msra.mxu0 0.0
    %1462 = vmatprep.subr.mxu0 0.0
    %1463 = vmatpush1.msra.mxu0 0.0
    %1464 = vmatprep.subr.mxu0 0.0
    %1465 = vmatpush1.msra.mxu0 0.0
    %1466 = vmatprep.subr.mxu0 0.0
    %1467 = vmatpush1.msra.mxu0 0.0
    %1468 = vmatprep.subr.mxu0 0.0
    %1469 = vmatpush1.msra.mxu0 0.0
    %1470 = vmatprep.subr.mxu0 0.0
    %1471 = vmatpush1.msra.mxu0 0.0
    %1472 = vmatprep.subr.mxu0 0.0
    %1473 = vmatpush1.msra.mxu0 0.0
    %1474 = vmatprep.subr.mxu0 0.0
    %1475 = vmatpush1.msra.mxu0 0.0
    %1476 = vmatprep.subr.mxu0 0.0
    %1477 = vmatpush1.msra.mxu0 0.0
    %1478 = vmatprep.subr.mxu0 0.0
    %1479 = vmatpush1.msra.mxu0 0.0
    %1480 = vmatprep.subr.mxu0 0.0
    %1481 = vmatpush1.msra.mxu0 0.0
    %1482 = vmatprep.subr.mxu0 0.0
    %1483 = vmatpush1.msra.mxu0 0.0
    %1484 = vmatprep.subr.mxu0 0.0
    %1485 = vmatpush1.msra.mxu0 0.0
    %1486 = vmatprep.subr.mxu0 0.0
    %1487 = vmatpush1.msra.mxu0 0.0
    %1488 = vmatprep.subr.mxu0 0.0
    %1489 = vmatpush1.msra.mxu0 0.0
    %1490 = vmatprep.subr.mxu0 0.0
    %1491 = vmatpush1.msra.mxu0 0.0
    %1492 = vmatprep.subr.mxu0 0.0
    %1493 = vmatpush1.msra.mxu0 0.0
    %1494 = vmatprep.subr.mxu0 0.0
    %1495 = vmatpush1.msra.mxu0 0.0
    %1496 = vmatprep.subr.mxu0 0.0
    %1497 = vmatpush1.msra.mxu0 0.0
    %1498 = vmatprep.mubr.f32.mxu0 0.0
    %1499 = vmatmul.mubr.f32.gmra.mrb[0].mxu0 %v1349
    %v1500 = vpop.f32.mrb[0].mxu0
    %v1501 = vadd.f32 %v1346, %v1500
    %v1502 = vpop.f32.mrb[0].mxu0
    %v1503 = vadd.f32 %v1346, %v1502
    %1504 = vdwg.mxu0
    %v1505 = vadd.f32 %v1430, %v797
    %v1506 = vadd.f32 %v1432, %v798
    %v1507 = vadd.f32 %v1501, %v799
    %v1508 = vadd.f32 %v1503, %v800
    %s1509 = scalar_lea.vmem %s2, 16
    %v1510 = vld [vmem:[%s1509] sm:$0xf]
    %s1511 = scalar_lea.vmem %s3, 16
    %v1512 = vld [vmem:[%s1511] sm:$0xf]
    %1514 = vset.pattern.permute.xlu0 0
    %1515 = vperm.xlu0 %1514, %v1512
    %v1516 = vpop.permute.xlu0 %1515
    %v1519 = vsel %vm280, %v1510, 0
    %1521 = vmatprep.subr.mxu0 %v254
    %1522 = vmatpush1.msra.mxu0 %v253
    %1523 = vmatprep.subr.mxu0 %v258
    %1524 = vmatpush1.msra.mxu0 %v257
    %1525 = vmatprep.subr.mxu0 %v262
    %1526 = vmatpush1.msra.mxu0 %v261
    %1527 = vmatprep.subr.mxu0 %v266
    %1528 = vmatpush1.msra.mxu0 %v265
    %1529 = vmatprep.subr.mxu0 %v288
    %1530 = vmatpush1.msra.mxu0 %v285
    %1531 = vmatprep.subr.mxu0 0.0
    %1532 = vmatpush1.msra.mxu0 0.0
    %1533 = vmatprep.subr.mxu0 0.0
    %1534 = vmatpush1.msra.mxu0 0.0
    %1535 = vmatprep.subr.mxu0 0.0
    %1536 = vmatpush1.msra.mxu0 0.0
    %1537 = vmatprep.subr.mxu0 0.0
    %1538 = vmatpush1.msra.mxu0 0.0
    %1539 = vmatprep.subr.mxu0 0.0
    %1540 = vmatpush1.msra.mxu0 0.0
    %1541 = vmatprep.subr.mxu0 0.0
    %1542 = vmatpush1.msra.mxu0 0.0
    %1543 = vmatprep.subr.mxu0 0.0
    %1544 = vmatpush1.msra.mxu0 0.0
    %1545 = vmatprep.subr.mxu0 0.0
    %1546 = vmatpush1.msra.mxu0 0.0
    %1547 = vmatprep.subr.mxu0 0.0
    %1548 = vmatpush1.msra.mxu0 0.0
    %1549 = vmatprep.subr.mxu0 0.0
    %1550 = vmatpush1.msra.mxu0 0.0
    %1551 = vmatprep.subr.mxu0 0.0
    %1552 = vmatpush1.msra.mxu0 0.0
    %1553 = vmatprep.subr.mxu0 0.0
    %1554 = vmatpush1.msra.mxu0 0.0
    %1555 = vmatprep.subr.mxu0 0.0
    %1556 = vmatpush1.msra.mxu0 0.0
    %1557 = vmatprep.subr.mxu0 0.0
    %1558 = vmatpush1.msra.mxu0 0.0
    %1559 = vmatprep.subr.mxu0 0.0
    %1560 = vmatpush1.msra.mxu0 0.0
    %1561 = vmatprep.subr.mxu0 0.0
    %1562 = vmatpush1.msra.mxu0 0.0
    %1563 = vmatprep.subr.mxu0 0.0
    %1564 = vmatpush1.msra.mxu0 0.0
    %1565 = vmatprep.subr.mxu0 0.0
    %1566 = vmatpush1.msra.mxu0 0.0
    %1567 = vmatprep.subr.mxu0 0.0
    %1568 = vmatpush1.msra.mxu0 0.0
    %1569 = vmatprep.subr.mxu0 0.0
    %1570 = vmatpush1.msra.mxu0 0.0
    %1571 = vmatprep.subr.mxu0 0.0
    %1572 = vmatpush1.msra.mxu0 0.0
    %1573 = vmatprep.subr.mxu0 0.0
    %1574 = vmatpush1.msra.mxu0 0.0
    %1575 = vmatprep.subr.mxu0 0.0
    %1576 = vmatpush1.msra.mxu0 0.0
    %1577 = vmatprep.subr.mxu0 0.0
    %1578 = vmatpush1.msra.mxu0 0.0
    %1579 = vmatprep.subr.mxu0 0.0
    %1580 = vmatpush1.msra.mxu0 0.0
    %1581 = vmatprep.subr.mxu0 0.0
    %1582 = vmatpush1.msra.mxu0 0.0
    %1583 = vmatprep.subr.mxu0 0.0
    %1584 = vmatpush1.msra.mxu0 0.0
    %1585 = vmatprep.mubr.f32.mxu0 0.0
    %1586 = vmatmul.mubr.f32.gmra.mrb[0].mxu0 %v1519
    %v1587 = vpop.f32.mrb[0].mxu0
    %v1588 = vadd.f32 %v1516, %v1587
    %v1589 = vpop.f32.mrb[0].mxu0
    %v1590 = vadd.f32 %v1516, %v1589
    %1591 = vdwg.mxu0
    %1592 = vmatprep.subr.mxu0 %v256
    %1593 = vmatpush1.msra.mxu0 %v255
    %1594 = vmatprep.subr.mxu0 %v260
    %1595 = vmatpush1.msra.mxu0 %v259
    %1596 = vmatprep.subr.mxu0 %v264
    %1597 = vmatpush1.msra.mxu0 %v263
    %1598 = vmatprep.subr.mxu0 %v268
    %1599 = vmatpush1.msra.mxu0 %v267
    %1600 = vmatprep.subr.mxu0 %v294
    %1601 = vmatpush1.msra.mxu0 %v291
    %1602 = vmatprep.subr.mxu0 0.0
    %1603 = vmatpush1.msra.mxu0 0.0
    %1604 = vmatprep.subr.mxu0 0.0
    %1605 = vmatpush1.msra.mxu0 0.0
    %1606 = vmatprep.subr.mxu0 0.0
    %1607 = vmatpush1.msra.mxu0 0.0
    %1608 = vmatprep.subr.mxu0 0.0
    %1609 = vmatpush1.msra.mxu0 0.0
    %1610 = vmatprep.subr.mxu0 0.0
    %1611 = vmatpush1.msra.mxu0 0.0
    %1612 = vmatprep.subr.mxu0 0.0
    %1613 = vmatpush1.msra.mxu0 0.0
    %1614 = vmatprep.subr.mxu0 0.0
    %1615 = vmatpush1.msra.mxu0 0.0
    %1616 = vmatprep.subr.mxu0 0.0
    %1617 = vmatpush1.msra.mxu0 0.0
    %1618 = vmatprep.subr.mxu0 0.0
    %1619 = vmatpush1.msra.mxu0 0.0
    %1620 = vmatprep.subr.mxu0 0.0
    %1621 = vmatpush1.msra.mxu0 0.0
    %1622 = vmatprep.subr.mxu0 0.0
    %1623 = vmatpush1.msra.mxu0 0.0
    %1624 = vmatprep.subr.mxu0 0.0
    %1625 = vmatpush1.msra.mxu0 0.0
    %1626 = vmatprep.subr.mxu0 0.0
    %1627 = vmatpush1.msra.mxu0 0.0
    %1628 = vmatprep.subr.mxu0 0.0
    %1629 = vmatpush1.msra.mxu0 0.0
    %1630 = vmatprep.subr.mxu0 0.0
    %1631 = vmatpush1.msra.mxu0 0.0
    %1632 = vmatprep.subr.mxu0 0.0
    %1633 = vmatpush1.msra.mxu0 0.0
    %1634 = vmatprep.subr.mxu0 0.0
    %1635 = vmatpush1.msra.mxu0 0.0
    %1636 = vmatprep.subr.mxu0 0.0
    %1637 = vmatpush1.msra.mxu0 0.0
    %1638 = vmatprep.subr.mxu0 0.0
    %1639 = vmatpush1.msra.mxu0 0.0
    %1640 = vmatprep.subr.mxu0 0.0
    %1641 = vmatpush1.msra.mxu0 0.0
    %1642 = vmatprep.subr.mxu0 0.0
    %1643 = vmatpush1.msra.mxu0 0.0
    %1644 = vmatprep.subr.mxu0 0.0
    %1645 = vmatpush1.msra.mxu0 0.0
    %1646 = vmatprep.subr.mxu0 0.0
    %1647 = vmatpush1.msra.mxu0 0.0
    %1648 = vmatprep.subr.mxu0 0.0
    %1649 = vmatpush1.msra.mxu0 0.0
    %1650 = vmatprep.subr.mxu0 0.0
    %1651 = vmatpush1.msra.mxu0 0.0
    %1652 = vmatprep.subr.mxu0 0.0
    %1653 = vmatpush1.msra.mxu0 0.0
    %1654 = vmatprep.subr.mxu0 0.0
    %1655 = vmatpush1.msra.mxu0 0.0
    %1656 = vmatprep.mubr.f32.mxu0 0.0
    %1657 = vmatmul.mubr.f32.gmra.mrb[0].mxu0 %v1519
    %v1658 = vpop.f32.mrb[0].mxu0
    %v1659 = vadd.f32 %v1516, %v1658
    %v1660 = vpop.f32.mrb[0].mxu0
    %v1661 = vadd.f32 %v1516, %v1660
    %1662 = vdwg.mxu0
    %vm1663 = vcmp.ge.f32.partialorder %v1588, 0.0
    %vm1664 = vcmp.ge.f32.partialorder %v1590, 0.0
    %vm1665 = vcmp.ge.f32.partialorder %v1659, 0.0
    %vm1666 = vcmp.ge.f32.partialorder %v1661, 0.0
    %v1667 = vmul.f32 %v442, %v1588
    %v1668 = vmul.f32 %v442, %v1590
    %v1669 = vmul.f32 %v442, %v1659
    %v1670 = vmul.f32 %v442, %v1661
    %v1671 = vsel %vm1663, %v1588, %v1667
    %v1672 = vsel %vm1664, %v1590, %v1668
    %v1673 = vsel %vm1665, %v1659, %v1669
    %v1674 = vsel %vm1666, %v1661, %v1670
    %1675 = vrot.lane.b32.xlu0 %v1671, 17
    %v1676 = vpop.permute.xlu0 %1675
    %1677 = vrot.lane.b32.xlu0 %v1672, 17
    %v1678 = vpop.permute.xlu0 %1677
    %1679 = vrot.lane.b32.xlu0 %v1673, 17
    %v1680 = vpop.permute.xlu0 %1679
    %1681 = vrot.lane.b32.xlu0 %v1674, 17
    %v1682 = vpop.permute.xlu0 %1681
    %v1683 = vsel %vm92, %v1680, %v1682
    %v1684 = vsel %vm92, %v1678, %v1680
    %v1685 = vsel %vm92, %v1676, %v1678
    %v1686 = vsel %vm92, %v1682, %v1676
    %1687 = vrot.lane.b32.xlu0 %v1671, 16
    %v1688 = vpop.permute.xlu0 %1687
    %1689 = vrot.lane.b32.xlu0 %v1672, 16
    %v1690 = vpop.permute.xlu0 %1689
    %1691 = vrot.lane.b32.xlu0 %v1673, 16
    %v1692 = vpop.permute.xlu0 %1691
    %1693 = vrot.lane.b32.xlu0 %v1674, 16
    %v1694 = vpop.permute.xlu0 %1693
    %v1695 = vsel %vm105, %v1692, %v1694
    %v1696 = vsel %vm105, %v1690, %v1692
    %v1697 = vsel %vm105, %v1688, %v1690
    %v1698 = vsel %vm105, %v1694, %v1688
    %1699 = vrot.lane.b32.xlu0 %v1671, 15
    %v1700 = vpop.permute.xlu0 %1699
    %1701 = vrot.lane.b32.xlu0 %v1672, 15
    %v1702 = vpop.permute.xlu0 %1701
    %1703 = vrot.lane.b32.xlu0 %v1673, 15
    %v1704 = vpop.permute.xlu0 %1703
    %1705 = vrot.lane.b32.xlu0 %v1674, 15
    %v1706 = vpop.permute.xlu0 %1705
    %v1707 = vsel %vm118, %v1704, %v1706
    %v1708 = vsel %vm118, %v1702, %v1704
    %v1709 = vsel %vm118, %v1700, %v1702
    %v1710 = vsel %vm118, %v1706, %v1700
    %1711 = vrot.lane.b32.xlu0 %v1671, 1
    %v1712 = vpop.permute.xlu0 %1711
    %1713 = vrot.lane.b32.xlu0 %v1672, 1
    %v1714 = vpop.permute.xlu0 %1713
    %1715 = vrot.lane.b32.xlu0 %v1673, 1
    %v1716 = vpop.permute.xlu0 %1715
    %1717 = vrot.lane.b32.xlu0 %v1674, 1
    %v1718 = vpop.permute.xlu0 %1717
    %v1719 = vsel %vm131, %v1716, %v1718
    %v1720 = vsel %vm131, %v1714, %v1716
    %v1721 = vsel %vm131, %v1712, %v1714
    %v1722 = vsel %vm131, %v1718, %v1712
    %1723 = vrot.lane.b32.xlu0 %v1671, 127
    %v1724 = vpop.permute.xlu0 %1723
    %1725 = vrot.lane.b32.xlu0 %v1672, 127
    %v1726 = vpop.permute.xlu0 %1725
    %1727 = vrot.lane.b32.xlu0 %v1673, 127
    %v1728 = vpop.permute.xlu0 %1727
    %1729 = vrot.lane.b32.xlu0 %v1674, 127
    %v1730 = vpop.permute.xlu0 %1729
    %v1731 = vsel %vm144, %v1728, %v1730
    %v1732 = vsel %vm144, %v1726, %v1728
    %v1733 = vsel %vm144, %v1724, %v1726
    %v1734 = vsel %vm144, %v1730, %v1724
    %1735 = vrot.lane.b32.xlu0 %v1671, 113
    %v1736 = vpop.permute.xlu0 %1735
    %1737 = vrot.lane.b32.xlu0 %v1672, 113
    %v1738 = vpop.permute.xlu0 %1737
    %1739 = vrot.lane.b32.xlu0 %v1673, 113
    %v1740 = vpop.permute.xlu0 %1739
    %1741 = vrot.lane.b32.xlu0 %v1674, 113
    %v1742 = vpop.permute.xlu0 %1741
    %v1743 = vsel %vm157, %v1740, %v1742
    %v1744 = vsel %vm157, %v1738, %v1740
    %v1745 = vsel %vm157, %v1736, %v1738
    %v1746 = vsel %vm157, %v1742, %v1736
    %1747 = vrot.lane.b32.xlu0 %v1671, 112
    %v1748 = vpop.permute.xlu0 %1747
    %1749 = vrot.lane.b32.xlu0 %v1672, 112
    %v1750 = vpop.permute.xlu0 %1749
    %1751 = vrot.lane.b32.xlu0 %v1673, 112
    %v1752 = vpop.permute.xlu0 %1751
    %1753 = vrot.lane.b32.xlu0 %v1674, 112
    %v1754 = vpop.permute.xlu0 %1753
    %v1755 = vsel %vm170, %v1752, %v1754
    %v1756 = vsel %vm170, %v1750, %v1752
    %v1757 = vsel %vm170, %v1748, %v1750
    %v1758 = vsel %vm170, %v1754, %v1748
    %1759 = vrot.lane.b32.xlu0 %v1671, 111
    %v1760 = vpop.permute.xlu0 %1759
    %1761 = vrot.lane.b32.xlu0 %v1672, 111
    %v1762 = vpop.permute.xlu0 %1761
    %1763 = vrot.lane.b32.xlu0 %v1673, 111
    %v1764 = vpop.permute.xlu0 %1763
    %1765 = vrot.lane.b32.xlu0 %v1674, 111
    %v1766 = vpop.permute.xlu0 %1765
    %v1767 = vsel %vm183, %v1764, %v1766
    %v1768 = vsel %vm183, %v1762, %v1764
    %v1769 = vsel %vm183, %v1760, %v1762
    %v1770 = vsel %vm183, %v1766, %v1760
    %v1775 = vrot.slane %v1698, 4
    %v1776 = vrot.slane %v1697, 4
    %v1777 = vrot.slane %v1696, 4
    %v1778 = vrot.slane %v1695, 4
    %v1787 = vrot.slane %v1722, 4
    %v1788 = vrot.slane %v1721, 4
    %v1789 = vrot.slane %v1720, 4
    %v1790 = vrot.slane %v1719, 4
    %v1799 = vrot.slane %v1733, 4
    %v1800 = vrot.slane %v1732, 4
    %v1801 = vrot.slane %v1731, 4
    %v1802 = vrot.slane %v1734, 4
    %v1811 = vrot.slane %v1757, 4
    %v1812 = vrot.slane %v1756, 4
    %v1813 = vrot.slane %v1755, 4
    %v1814 = vrot.slane %v1758, 4
    %v1819 = vsel %vm236, %v1686, %v1775
    %v1820 = vsel %vm236, %v1685, %v1776
    %v1821 = vsel %vm236, %v1684, %v1777
    %v1822 = vsel %vm236, %v1683, %v1778
    %v1823 = vsel %vm236, %v1710, %v1787
    %v1824 = vsel %vm236, %v1709, %v1788
    %v1825 = vsel %vm236, %v1708, %v1789
    %v1826 = vsel %vm236, %v1707, %v1790
    %v1827 = vsel %vm236, %v1671, %v1799
    %v1828 = vsel %vm236, %v1672, %v1800
    %v1829 = vsel %vm236, %v1673, %v1801
    %v1830 = vsel %vm236, %v1674, %v1802
    %v1831 = vsel %vm236, %v1745, %v1811
    %v1832 = vsel %vm236, %v1744, %v1812
    %v1833 = vsel %vm236, %v1743, %v1813
    %v1834 = vsel %vm236, %v1746, %v1814
    %v1835 = vmul.f32 %v1819, %v60
    %v1836 = vmul.f32 %v1820, %v61
    %v1837 = vmul.f32 %v1821, %v62
    %v1838 = vmul.f32 %v1822, %v63
    %v1839 = vmul.f32 %v1823, %v64
    %v1840 = vmul.f32 %v1824, %v65
    %v1841 = vmul.f32 %v1825, %v66
    %v1842 = vmul.f32 %v1826, %v67
    %v1843 = vmul.f32 %v1827, %v68
    %v1844 = vmul.f32 %v1828, %v69
    %v1845 = vmul.f32 %v1829, %v70
    %v1846 = vmul.f32 %v1830, %v71
    %v1847 = vmul.f32 %v1831, %v72
    %v1848 = vmul.f32 %v1832, %v73
    %v1849 = vmul.f32 %v1833, %v74
    %v1850 = vmul.f32 %v1834, %v75
    %v1851 = vmul.f32 %v1769, %v76
    %v1852 = vmul.f32 %v1768, %v77
    %v1853 = vmul.f32 %v1767, %v78
    %v1854 = vmul.f32 %v1770, %v79
    %s1855 = scalar_lea.vmem %s2, 20
    %v1856 = vld [vmem:[%s1855] sm:$0xf]
    %s1857 = scalar_lea.vmem %s3, 20
    %v1858 = vld [vmem:[%s1857] sm:$0xf]
    %1860 = vset.pattern.permute.xlu0 0
    %1861 = vperm.xlu0 %1860, %v1858
    %v1862 = vpop.permute.xlu0 %1861
    %v1865 = vsel %vm280, %v1856, 0
    %v1868 = vsel %vm236, %v1851, 0
    %v1871 = vsel %vm236, %v1852, 0
    %v1874 = vsel %vm236, %v1853, 0
    %v1877 = vsel %vm236, %v1854, 0
    %1879 = vmatprep.subr.mxu0 %v1836
    %1880 = vmatpush1.msra.mxu0 %v1835
    %1881 = vmatprep.subr.mxu0 %v1840
    %1882 = vmatpush1.msra.mxu0 %v1839
    %1883 = vmatprep.subr.mxu0 %v1844
    %1884 = vmatpush1.msra.mxu0 %v1843
    %1885 = vmatprep.subr.mxu0 %v1848
    %1886 = vmatpush1.msra.mxu0 %v1847
    %1887 = vmatprep.subr.mxu0 %v1871
    %1888 = vmatpush1.msra.mxu0 %v1868
    %1889 = vmatprep.subr.mxu0 0.0
    %1890 = vmatpush1.msra.mxu0 0.0
    %1891 = vmatprep.subr.mxu0 0.0
    %1892 = vmatpush1.msra.mxu0 0.0
    %1893 = vmatprep.subr.mxu0 0.0
    %1894 = vmatpush1.msra.mxu0 0.0
    %1895 = vmatprep.subr.mxu0 0.0
    %1896 = vmatpush1.msra.mxu0 0.0
    %1897 = vmatprep.subr.mxu0 0.0
    %1898 = vmatpush1.msra.mxu0 0.0
    %1899 = vmatprep.subr.mxu0 0.0
    %1900 = vmatpush1.msra.mxu0 0.0
    %1901 = vmatprep.subr.mxu0 0.0
    %1902 = vmatpush1.msra.mxu0 0.0
    %1903 = vmatprep.subr.mxu0 0.0
    %1904 = vmatpush1.msra.mxu0 0.0
    %1905 = vmatprep.subr.mxu0 0.0
    %1906 = vmatpush1.msra.mxu0 0.0
    %1907 = vmatprep.subr.mxu0 0.0
    %1908 = vmatpush1.msra.mxu0 0.0
    %1909 = vmatprep.subr.mxu0 0.0
    %1910 = vmatpush1.msra.mxu0 0.0
    %1911 = vmatprep.subr.mxu0 0.0
    %1912 = vmatpush1.msra.mxu0 0.0
    %1913 = vmatprep.subr.mxu0 0.0
    %1914 = vmatpush1.msra.mxu0 0.0
    %1915 = vmatprep.subr.mxu0 0.0
    %1916 = vmatpush1.msra.mxu0 0.0
    %1917 = vmatprep.subr.mxu0 0.0
    %1918 = vmatpush1.msra.mxu0 0.0
    %1919 = vmatprep.subr.mxu0 0.0
    %1920 = vmatpush1.msra.mxu0 0.0
    %1921 = vmatprep.subr.mxu0 0.0
    %1922 = vmatpush1.msra.mxu0 0.0
    %1923 = vmatprep.subr.mxu0 0.0
    %1924 = vmatpush1.msra.mxu0 0.0
    %1925 = vmatprep.subr.mxu0 0.0
    %1926 = vmatpush1.msra.mxu0 0.0
    %1927 = vmatprep.subr.mxu0 0.0
    %1928 = vmatpush1.msra.mxu0 0.0
    %1929 = vmatprep.subr.mxu0 0.0
    %1930 = vmatpush1.msra.mxu0 0.0
    %1931 = vmatprep.subr.mxu0 0.0
    %1932 = vmatpush1.msra.mxu0 0.0
    %1933 = vmatprep.subr.mxu0 0.0
    %1934 = vmatpush1.msra.mxu0 0.0
    %1935 = vmatprep.subr.mxu0 0.0
    %1936 = vmatpush1.msra.mxu0 0.0
    %1937 = vmatprep.subr.mxu0 0.0
    %1938 = vmatpush1.msra.mxu0 0.0
    %1939 = vmatprep.subr.mxu0 0.0
    %1940 = vmatpush1.msra.mxu0 0.0
    %1941 = vmatprep.subr.mxu0 0.0
    %1942 = vmatpush1.msra.mxu0 0.0
    %1943 = vmatprep.mubr.f32.mxu0 0.0
    %1944 = vmatmul.mubr.f32.gmra.mrb[0].mxu0 %v1865
    %v1945 = vpop.f32.mrb[0].mxu0
    %v1946 = vadd.f32 %v1862, %v1945
    %v1947 = vpop.f32.mrb[0].mxu0
    %v1948 = vadd.f32 %v1862, %v1947
    %1949 = vdwg.mxu0
    %1950 = vmatprep.subr.mxu0 %v1838
    %1951 = vmatpush1.msra.mxu0 %v1837
    %1952 = vmatprep.subr.mxu0 %v1842
    %1953 = vmatpush1.msra.mxu0 %v1841
    %1954 = vmatprep.subr.mxu0 %v1846
    %1955 = vmatpush1.msra.mxu0 %v1845
    %1956 = vmatprep.subr.mxu0 %v1850
    %1957 = vmatpush1.msra.mxu0 %v1849
    %1958 = vmatprep.subr.mxu0 %v1877
    %1959 = vmatpush1.msra.mxu0 %v1874
    %1960 = vmatprep.subr.mxu0 0.0
    %1961 = vmatpush1.msra.mxu0 0.0
    %1962 = vmatprep.subr.mxu0 0.0
    %1963 = vmatpush1.msra.mxu0 0.0
    %1964 = vmatprep.subr.mxu0 0.0
    %1965 = vmatpush1.msra.mxu0 0.0
    %1966 = vmatprep.subr.mxu0 0.0
    %1967 = vmatpush1.msra.mxu0 0.0
    %1968 = vmatprep.subr.mxu0 0.0
    %1969 = vmatpush1.msra.mxu0 0.0
    %1970 = vmatprep.subr.mxu0 0.0
    %1971 = vmatpush1.msra.mxu0 0.0
    %1972 = vmatprep.subr.mxu0 0.0
    %1973 = vmatpush1.msra.mxu0 0.0
    %1974 = vmatprep.subr.mxu0 0.0
    %1975 = vmatpush1.msra.mxu0 0.0
    %1976 = vmatprep.subr.mxu0 0.0
    %1977 = vmatpush1.msra.mxu0 0.0
    %1978 = vmatprep.subr.mxu0 0.0
    %1979 = vmatpush1.msra.mxu0 0.0
    %1980 = vmatprep.subr.mxu0 0.0
    %1981 = vmatpush1.msra.mxu0 0.0
    %1982 = vmatprep.subr.mxu0 0.0
    %1983 = vmatpush1.msra.mxu0 0.0
    %1984 = vmatprep.subr.mxu0 0.0
    %1985 = vmatpush1.msra.mxu0 0.0
    %1986 = vmatprep.subr.mxu0 0.0
    %1987 = vmatpush1.msra.mxu0 0.0
    %1988 = vmatprep.subr.mxu0 0.0
    %1989 = vmatpush1.msra.mxu0 0.0
    %1990 = vmatprep.subr.mxu0 0.0
    %1991 = vmatpush1.msra.mxu0 0.0
    %1992 = vmatprep.subr.mxu0 0.0
    %1993 = vmatpush1.msra.mxu0 0.0
    %1994 = vmatprep.subr.mxu0 0.0
    %1995 = vmatpush1.msra.mxu0 0.0
    %1996 = vmatprep.subr.mxu0 0.0
    %1997 = vmatpush1.msra.mxu0 0.0
    %1998 = vmatprep.subr.mxu0 0.0
    %1999 = vmatpush1.msra.mxu0 0.0
    %2000 = vmatprep.subr.mxu0 0.0
    %2001 = vmatpush1.msra.mxu0 0.0
    %2002 = vmatprep.subr.mxu0 0.0
    %2003 = vmatpush1.msra.mxu0 0.0
    %2004 = vmatprep.subr.mxu0 0.0
    %2005 = vmatpush1.msra.mxu0 0.0
    %2006 = vmatprep.subr.mxu0 0.0
    %2007 = vmatpush1.msra.mxu0 0.0
    %2008 = vmatprep.subr.mxu0 0.0
    %2009 = vmatpush1.msra.mxu0 0.0
    %2010 = vmatprep.subr.mxu0 0.0
    %2011 = vmatpush1.msra.mxu0 0.0
    %2012 = vmatprep.subr.mxu0 0.0
    %2013 = vmatpush1.msra.mxu0 0.0
    %2014 = vmatprep.mubr.f32.mxu0 0.0
    %2015 = vmatmul.mubr.f32.gmra.mrb[0].mxu0 %v1865
    %v2016 = vpop.f32.mrb[0].mxu0
    %v2017 = vadd.f32 %v1862, %v2016
    %v2018 = vpop.f32.mrb[0].mxu0
    %v2019 = vadd.f32 %v1862, %v2018
    %2020 = vdwg.mxu0
    %v2021 = vadd.f32 %v1946, %v51
    %v2022 = vadd.f32 %v1948, %v55
    %v2023 = vadd.f32 %v2017, %v53
    %v2024 = vadd.f32 %v2019, %v58
    %v2029 = vrot.slane %v2021, 4
    %v2030 = vrot.slane %v2022, 4
    %v2031 = vrot.slane %v2023, 4
    %v2032 = vrot.slane %v2024, 4
    %v2037 = vsel %vm236, %v1505, %v2029
    %v2038 = vsel %vm236, %v1506, %v2030
    %v2039 = vsel %vm236, %v1507, %v2031
    %v2040 = vsel %vm236, %v1508, %v2032
    %2041 = vst [vmem:[#allocation8] sm:$0xff] %v2037
    %2042 = vst [vmem:[#allocation8 + $0x8] sm:$0xff] %v2038
    %s2043 = scalar_lea.vmem [#allocation8], 16
    %2044 = vst [vmem:[%s2043] sm:$0xff] %v2039
    %2045 = vst [vmem:[%s2043 + $0x8] sm:$0xff] %v2040
    // Predicated region
    $region30: #{tpu_custom_call.1} parent=1 // pred_check
      _
    $region31: #{tpu_custom_call.1} parent=1 // pred_check_branch
      %2047 = sbr.rel (0) target = $region33
    $region32: #{tpu_custom_call.1} parent=1 // pred_region
      %s2049 = ssub.s32 512, 512
      %2050 = vsyncadd [#allocation5], %s2049
      %s2051 = sshll.u32 [#allocation8], 4
      %s2052 = int_to_ptr.vmem [resolvable:$true] %s2051
      %2057 = dma.vmem_to_hbm [thread:$0]  %s2052, 512, %s5, [#allocation5], 256, 256, 16
    $region33: #{tpu_custom_call.1} parent=1 // pred_fallthru
      _
    // Predicated region
    $region34: #{tpu_custom_call.1} parent=1 // pred_check
      _
    $region35: #{tpu_custom_call.1} parent=1 // pred_check_branch
      %2059 = sbr.rel (0) target = $region37
    $region36: #{tpu_custom_call.1} parent=1 // pred_region
      %2060 = dma.done [#allocation5], 512
    $region37: #{tpu_custom_call.1} parent=1 // pred_fallthru
      _
    %2061 = vsyncpa [#allocation4], 1
    %2062 = vsyncpa [#allocation7], 1
    %2063 = vsyncpa [#allocation5], 1

</llo_original>
